<compile_context>
chip_gen: v5e
topology: v5e:2x2
jax: 0.10.0
libtpu: 0.0.40
codegen_flags: <defaults>
</compile_context>

<pallas_src>
import functools

import jax
import jax.numpy as jnp
from jax.experimental import pallas as pl
from jax.experimental.pallas import tpu as pltpu


def combined_kernel(x_ref, wconv_ref, bconv_ref, whead_ref, bhead_ref,
                    out_ref, pooled_ref, *, rt):
    # x_ref:      (tb, H+2, W+2, Cin)   padded NHWC batch tile (resident across s)
    # wconv_ref:  (9, Cin, Cout)        conv taps, (dy, dx) major
    # bconv_ref:  (1, Cout)
    # whead_ref:  (Cout, 2)             fused [cls | energy] head weights
    # bhead_ref:  (1, 2)
    # out_ref:    (1, tb, 2)            fused head outputs for this batch tile
    # pooled_ref: (tb, Cout) f32        GAP sum accumulator (VMEM scratch)
    tb, hp, wp, cin = x_ref.shape
    h, w = hp - 2, wp - 2
    cout = wconv_ref.shape[-1]

    s = pl.program_id(1)
    n_s = pl.num_programs(1)

    @pl.when(s == 0)
    def _():
        pooled_ref[...] = jnp.zeros_like(pooled_ref)

    # Rows of output handled this step: [s*rt, s*rt + rt); need +2 halo rows of input.
    row0 = pl.multiple_of(s * rt, rt)
    xs = x_ref[:, pl.ds(row0, rt + 2), :, :]          # (tb, rt+2, W+2, Cin)
    wconv = wconv_ref[...]                            # (9, Cin, Cout)

    rows = tb * rt * w
    acc = jnp.zeros((rows, cout), jnp.float32)
    # 3x3 conv as 9 shifted-tap matmuls, f32 accumulation on the MXU.
    for t in range(9):
        dy, dx = divmod(t, 3)
        tap = xs[:, dy:dy + rt, dx:dx + w, :].reshape(rows, cin)
        acc = acc + jnp.dot(tap, wconv[t], preferred_element_type=jnp.float32)

    # Bias + ReLU, then fold the global average pool into a running sum.
    conv = jnp.maximum(acc + bconv_ref[...], 0.0)                       # (rows, Cout)
    pooled_ref[...] += jnp.sum(conv.reshape(tb, rt * w, cout), axis=1)  # (tb, Cout)

    @pl.when(s == n_s - 1)
    def _():
        feats = pooled_ref[...] * (1.0 / float(h * w))                  # (tb, Cout)
        logits = jnp.dot(feats, whead_ref[...],
                         preferred_element_type=jnp.float32) + bhead_ref[...]
        cls = 1.0 / (1.0 + jnp.exp(-logits[:, 0:1]))                    # sigmoid head
        energy = jnp.exp(logits[:, 1:2])                                # exp head
        out_ref[...] = jnp.concatenate([cls, energy], axis=-1).reshape(1, tb, 2)


def combined_model_forward(x, w_conv, b_conv, w_cls, b_cls, w_en, b_en,
                           *, tb=1, rows_per_step=8, compute_dtype=jnp.float32):
    """x: (B, Cin, H, W) float32 NCHW (like PyTorch). Returns (cls, energy), each (B, 1)."""
    B, Cin, H, W = x.shape
    Cout = w_conv.shape[0]

    # Batch tiling (parallel grid axis) and spatial row-chunking (reduction axis).
    nb = pl.cdiv(B, tb)
    Bp = nb * tb
    rt = rows_per_step if (rows_per_step is not None and H % rows_per_step == 0) else H
    n_s = H // rt

    # NCHW -> NHWC, zero-pad spatially by 1 (conv padding=1), pad batch to nb*tb.
    x_nhwc = jnp.transpose(x, (0, 2, 3, 1))
    xp = jnp.pad(x_nhwc, ((0, Bp - B), (1, 1), (1, 1), (0, 0))).astype(compute_dtype)

    # Conv weight (Cout, Cin, 3, 3) -> (ky, kx, Cin, Cout) -> (9, Cin, Cout).
    wconv = jnp.transpose(w_conv, (2, 3, 1, 0)).reshape(9, Cin, Cout).astype(compute_dtype)
    bconv = b_conv.reshape(1, Cout).astype(jnp.float32)

    # Fused heads: column 0 = cls, column 1 = energy.  PyTorch Linear weight is (1, C).
    whead = jnp.concatenate([w_cls.T, w_en.T], axis=1).astype(jnp.float32)   # (Cout, 2)
    bhead = jnp.concatenate([b_cls, b_en]).reshape(1, 2).astype(jnp.float32)

    kernel = functools.partial(combined_kernel, rt=rt)

    out = pl.pallas_call(
        kernel,
        out_shape=jax.ShapeDtypeStruct((nb, tb, 2), jnp.float32),
        grid_spec=pltpu.PrefetchScalarGridSpec(
            num_scalar_prefetch=0,
            grid=(nb, n_s),
            in_specs=[
                pl.BlockSpec((tb, H + 2, W + 2, Cin), lambda b, s: (b, 0, 0, 0)),
                pl.BlockSpec((9, Cin, Cout), lambda b, s: (0, 0, 0)),
                pl.BlockSpec((1, Cout), lambda b, s: (0, 0)),
                pl.BlockSpec((Cout, 2), lambda b, s: (0, 0)),
                pl.BlockSpec((1, 2), lambda b, s: (0, 0)),
            ],
            out_specs=pl.BlockSpec((1, tb, 2), lambda b, s: (b, 0, 0)),
            scratch_shapes=[pltpu.VMEM((tb, Cout), jnp.float32)],
        ),
        compiler_params=pltpu.CompilerParams(
            dimension_semantics=("parallel", "arbitrary"),
            vmem_limit_bytes=32 * 1024 * 1024,
        ),
    )(xp, wconv, bconv, whead, bhead)

    out = out.reshape(Bp, 2)[:B]
    return out[:, 0:1], out[:, 1:2]


def reference_forward(x, w_conv, b_conv, w_cls, b_cls, w_en, b_en):
    conv = jax.lax.conv_general_dilated(
        x, w_conv, window_strides=(1, 1), padding='SAME',
        dimension_numbers=('NCHW', 'OIHW', 'NCHW'))
    conv = jax.nn.relu(conv + b_conv[None, :, None, None])
    feats = conv.mean(axis=(2, 3))                      # (B, Cout) == view(B, -1) after 1x1 pool
    cls = jax.nn.sigmoid(feats @ w_cls.T + b_cls)
    energy = jnp.exp(feats @ w_en.T + b_en)
    return cls, energy


if __name__ == "__main__":
    B, Cin, H, W = 2, 3, 16, 16
    Cout = 32  # n_feats of the synthetic backbone

    key = jax.random.PRNGKey(0)
    kx, kwc, kbc, kwcl, kbcl, kwe, kbe = jax.random.split(key, 7)

    x = jax.random.normal(kx, (B, Cin, H, W), dtype=jnp.float32)
    w_conv = jax.random.normal(kwc, (Cout, Cin, 3, 3), dtype=jnp.float32) * 0.1
    b_conv = jax.random.normal(kbc, (Cout,), dtype=jnp.float32) * 0.1
    w_cls = jax.random.normal(kwcl, (1, Cout), dtype=jnp.float32) * 0.1
    b_cls = jax.random.normal(kbcl, (1,), dtype=jnp.float32) * 0.1
    w_en = jax.random.normal(kwe, (1, Cout), dtype=jnp.float32) * 0.1
    b_en = jax.random.normal(kbe, (1,), dtype=jnp.float32) * 0.1

    cls_ref, energy_ref = reference_forward(x, w_conv, b_conv, w_cls, b_cls, w_en, b_en)

    # f32 path (exact-ish).
    cls, energy = combined_model_forward(x, w_conv, b_conv, w_cls, b_cls, w_en, b_en)
    jax.block_until_ready((cls, energy))
    assert jnp.allclose(cls, cls_ref, atol=1e-5, rtol=1e-5), (cls, cls_ref)
    assert jnp.allclose(energy, energy_ref, atol=1e-4, rtol=1e-4), (energy, energy_ref)

    # bf16 MXU-input path (f32 accumulation) — preferred on v6e/v7x; looser tolerance.
    cls_bf, energy_bf = combined_model_forward(
        x, w_conv, b_conv, w_cls, b_cls, w_en, b_en, compute_dtype=jnp.bfloat16)
    jax.block_until_ready((cls_bf, energy_bf))
    assert jnp.allclose(cls_bf, cls_ref, atol=5e-2, rtol=5e-2), (cls_bf, cls_ref)
    assert jnp.allclose(energy_bf, energy_ref, atol=5e-2, rtol=5e-2), (energy_bf, energy_ref)

    print("KERNEL_OK")
</pallas_src>

<mosaic_0001>
module attributes {stable_mosaic.version = 11 : i64} {
  func.func @combined_kernel(%arg0: i32, %arg1: i32, %arg2: memref<1x18x18x3xf32, #tpu.memory_space<vmem>>, %arg3: memref<9x3x32xf32, #tpu.memory_space<vmem>>, %arg4: memref<1x32xf32, #tpu.memory_space<vmem>>, %arg5: memref<32x2xf32, #tpu.memory_space<vmem>>, %arg6: memref<1x2xf32, #tpu.memory_space<vmem>>, %arg7: memref<1x1x2xf32, #tpu.memory_space<vmem>>, %arg8: memref<1x32xf32, #tpu.memory_space<vmem>>) attributes {dimension_semantics = [#tpu.dimension_semantics<parallel>, #tpu.dimension_semantics<arbitrary>], iteration_bounds = array<i64: 2, 2>, scalar_prefetch = 0 : i64, scratch_operands = 1 : i64, tpu.core_type = #tpu.core_type<tc>, window_params = [{transform_indices = @transform_0, window_bounds = array<i64: 1, 18, 18, 3>}, {pipeline_mode = #tpu.pipeline_mode<synchronous>, transform_indices = @transform_1, window_bounds = array<i64: 9, 3, 32>}, {pipeline_mode = #tpu.pipeline_mode<synchronous>, transform_indices = @transform_2, window_bounds = array<i64: 1, 32>}, {pipeline_mode = #tpu.pipeline_mode<synchronous>, transform_indices = @transform_3, window_bounds = array<i64: 32, 2>}, {pipeline_mode = #tpu.pipeline_mode<synchronous>, transform_indices = @transform_4, window_bounds = array<i64: 1, 2>}, {transform_indices = @transform_5, window_bounds = array<i64: 1, 1, 2>}]} {
    %c0_i32 = arith.constant 0 : i32
    %0 = arith.cmpi eq, %arg1, %c0_i32 : i32
    %1 = arith.extui %0 : i1 to i32
    %c0_i32_0 = arith.constant 0 : i32
    %2 = arith.cmpi ne, %1, %c0_i32_0 : i32
    scf.if %2 {
      %cst_24 = arith.constant 0.000000e+00 : f32
      %76 = vector.broadcast %cst_24 : f32 to vector<1x32xf32>
      %c0_25 = arith.constant 0 : index
      %c0_26 = arith.constant 0 : index
      %77 = vector.load %arg8[%c0_25, %c0_26] : memref<1x32xf32, #tpu.memory_space<vmem>>, vector<1x32xf32>
      tpu.vector_store %arg8[%c0_25, %c0_26], %76 {strides = array<i32>} : memref<1x32xf32, #tpu.memory_space<vmem>>, vector<1x32xf32>,
    } else {
    }
    %c8_i32 = arith.constant 8 : i32
    %3 = arith.muli %arg1, %c8_i32 : i32
    %4 = tpu.assume_multiple %3, 8 : i32
    %c0 = arith.constant 0 : index
    %5 = arith.index_cast %4 : i32 to index
    %c0_1 = arith.constant 0 : index
    %c0_2 = arith.constant 0 : index
    %6 = vector.load %arg2[%c0, %5, %c0_1, %c0_2] : memref<1x18x18x3xf32, #tpu.memory_space<vmem>>, vector<1x10x18x3xf32>
    %c0_3 = arith.constant 0 : index
    %c0_4 = arith.constant 0 : index
    %c0_5 = arith.constant 0 : index
    %7 = vector.load %arg3[%c0_3, %c0_4, %c0_5] : memref<9x3x32xf32, #tpu.memory_space<vmem>>, vector<9x3x32xf32>
    %cst = arith.constant 0.000000e+00 : f32
    %8 = vector.broadcast %cst : f32 to vector<128x32xf32>
    %9 = vector.extract_strided_slice %6 {offsets = [0, 0, 0, 0], sizes = [1, 8, 16, 3], strides = [1, 1, 1, 1]} : vector<1x10x18x3xf32> to vector<1x8x16x3xf32>
    %10 = vector.shape_cast %9 : vector<1x8x16x3xf32> to vector<128x3xf32>
    %11 = vector.extract_strided_slice %7 {offsets = [0, 0, 0], sizes = [1, 3, 32], strides = [1, 1, 1]} : vector<9x3x32xf32> to vector<1x3x32xf32>
    %12 = vector.shape_cast %11 : vector<1x3x32xf32> to vector<3x32xf32>
    %cst_6 = arith.constant dense<0.000000e+00> : vector<128x32xf32>
    %13 = tpu.matmul %10, %12, %cst_6 {dimension_numbers = #tpu.dot_dimension_numbers<[1], [0], [0], [1], [0, 0, 1, 1], [], []>} : vector<128x3xf32>, vector<3x32xf32>, vector<128x32xf32> -> vector<128x32xf32>
    %14 = arith.addf %8, %13 : vector<128x32xf32>
    %15 = vector.extract_strided_slice %6 {offsets = [0, 0, 1, 0], sizes = [1, 8, 16, 3], strides = [1, 1, 1, 1]} : vector<1x10x18x3xf32> to vector<1x8x16x3xf32>
    %16 = vector.shape_cast %15 : vector<1x8x16x3xf32> to vector<128x3xf32>
    %17 = vector.extract_strided_slice %7 {offsets = [1, 0, 0], sizes = [1, 3, 32], strides = [1, 1, 1]} : vector<9x3x32xf32> to vector<1x3x32xf32>
    %18 = vector.shape_cast %17 : vector<1x3x32xf32> to vector<3x32xf32>
    %cst_7 = arith.constant dense<0.000000e+00> : vector<128x32xf32>
    %19 = tpu.matmul %16, %18, %cst_7 {dimension_numbers = #tpu.dot_dimension_numbers<[1], [0], [0], [1], [0, 0, 1, 1], [], []>} : vector<128x3xf32>, vector<3x32xf32>, vector<128x32xf32> -> vector<128x32xf32>
    %20 = arith.addf %14, %19 : vector<128x32xf32>
    %21 = vector.extract_strided_slice %6 {offsets = [0, 0, 2, 0], sizes = [1, 8, 16, 3], strides = [1, 1, 1, 1]} : vector<1x10x18x3xf32> to vector<1x8x16x3xf32>
    %22 = vector.shape_cast %21 : vector<1x8x16x3xf32> to vector<128x3xf32>
    %23 = vector.extract_strided_slice %7 {offsets = [2, 0, 0], sizes = [1, 3, 32], strides = [1, 1, 1]} : vector<9x3x32xf32> to vector<1x3x32xf32>
    %24 = vector.shape_cast %23 : vector<1x3x32xf32> to vector<3x32xf32>
    %cst_8 = arith.constant dense<0.000000e+00> : vector<128x32xf32>
    %25 = tpu.matmul %22, %24, %cst_8 {dimension_numbers = #tpu.dot_dimension_numbers<[1], [0], [0], [1], [0, 0, 1, 1], [], []>} : vector<128x3xf32>, vector<3x32xf32>, vector<128x32xf32> -> vector<128x32xf32>
    %26 = arith.addf %20, %25 : vector<128x32xf32>
    %27 = vector.extract_strided_slice %6 {offsets = [0, 1, 0, 0], sizes = [1, 8, 16, 3], strides = [1, 1, 1, 1]} : vector<1x10x18x3xf32> to vector<1x8x16x3xf32>
    %28 = vector.shape_cast %27 : vector<1x8x16x3xf32> to vector<128x3xf32>
    %29 = vector.extract_strided_slice %7 {offsets = [3, 0, 0], sizes = [1, 3, 32], strides = [1, 1, 1]} : vector<9x3x32xf32> to vector<1x3x32xf32>
    %30 = vector.shape_cast %29 : vector<1x3x32xf32> to vector<3x32xf32>
    %cst_9 = arith.constant dense<0.000000e+00> : vector<128x32xf32>
    %31 = tpu.matmul %28, %30, %cst_9 {dimension_numbers = #tpu.dot_dimension_numbers<[1], [0], [0], [1], [0, 0, 1, 1], [], []>} : vector<128x3xf32>, vector<3x32xf32>, vector<128x32xf32> -> vector<128x32xf32>
    %32 = arith.addf %26, %31 : vector<128x32xf32>
    %33 = vector.extract_strided_slice %6 {offsets = [0, 1, 1, 0], sizes = [1, 8, 16, 3], strides = [1, 1, 1, 1]} : vector<1x10x18x3xf32> to vector<1x8x16x3xf32>
    %34 = vector.shape_cast %33 : vector<1x8x16x3xf32> to vector<128x3xf32>
    %35 = vector.extract_strided_slice %7 {offsets = [4, 0, 0], sizes = [1, 3, 32], strides = [1, 1, 1]} : vector<9x3x32xf32> to vector<1x3x32xf32>
    %36 = vector.shape_cast %35 : vector<1x3x32xf32> to vector<3x32xf32>
    %cst_10 = arith.constant dense<0.000000e+00> : vector<128x32xf32>
    %37 = tpu.matmul %34, %36, %cst_10 {dimension_numbers = #tpu.dot_dimension_numbers<[1], [0], [0], [1], [0, 0, 1, 1], [], []>} : vector<128x3xf32>, vector<3x32xf32>, vector<128x32xf32> -> vector<128x32xf32>
    %38 = arith.addf %32, %37 : vector<128x32xf32>
    %39 = vector.extract_strided_slice %6 {offsets = [0, 1, 2, 0], sizes = [1, 8, 16, 3], strides = [1, 1, 1, 1]} : vector<1x10x18x3xf32> to vector<1x8x16x3xf32>
    %40 = vector.shape_cast %39 : vector<1x8x16x3xf32> to vector<128x3xf32>
    %41 = vector.extract_strided_slice %7 {offsets = [5, 0, 0], sizes = [1, 3, 32], strides = [1, 1, 1]} : vector<9x3x32xf32> to vector<1x3x32xf32>
    %42 = vector.shape_cast %41 : vector<1x3x32xf32> to vector<3x32xf32>
    %cst_11 = arith.constant dense<0.000000e+00> : vector<128x32xf32>
    %43 = tpu.matmul %40, %42, %cst_11 {dimension_numbers = #tpu.dot_dimension_numbers<[1], [0], [0], [1], [0, 0, 1, 1], [], []>} : vector<128x3xf32>, vector<3x32xf32>, vector<128x32xf32> -> vector<128x32xf32>
    %44 = arith.addf %38, %43 : vector<128x32xf32>
    %45 = vector.extract_strided_slice %6 {offsets = [0, 2, 0, 0], sizes = [1, 8, 16, 3], strides = [1, 1, 1, 1]} : vector<1x10x18x3xf32> to vector<1x8x16x3xf32>
    %46 = vector.shape_cast %45 : vector<1x8x16x3xf32> to vector<128x3xf32>
    %47 = vector.extract_strided_slice %7 {offsets = [6, 0, 0], sizes = [1, 3, 32], strides = [1, 1, 1]} : vector<9x3x32xf32> to vector<1x3x32xf32>
    %48 = vector.shape_cast %47 : vector<1x3x32xf32> to vector<3x32xf32>
    %cst_12 = arith.constant dense<0.000000e+00> : vector<128x32xf32>
    %49 = tpu.matmul %46, %48, %cst_12 {dimension_numbers = #tpu.dot_dimension_numbers<[1], [0], [0], [1], [0, 0, 1, 1], [], []>} : vector<128x3xf32>, vector<3x32xf32>, vector<128x32xf32> -> vector<128x32xf32>
    %50 = arith.addf %44, %49 : vector<128x32xf32>
    %51 = vector.extract_strided_slice %6 {offsets = [0, 2, 1, 0], sizes = [1, 8, 16, 3], strides = [1, 1, 1, 1]} : vector<1x10x18x3xf32> to vector<1x8x16x3xf32>
    %52 = vector.shape_cast %51 : vector<1x8x16x3xf32> to vector<128x3xf32>
    %53 = vector.extract_strided_slice %7 {offsets = [7, 0, 0], sizes = [1, 3, 32], strides = [1, 1, 1]} : vector<9x3x32xf32> to vector<1x3x32xf32>
    %54 = vector.shape_cast %53 : vector<1x3x32xf32> to vector<3x32xf32>
    %cst_13 = arith.constant dense<0.000000e+00> : vector<128x32xf32>
    %55 = tpu.matmul %52, %54, %cst_13 {dimension_numbers = #tpu.dot_dimension_numbers<[1], [0], [0], [1], [0, 0, 1, 1], [], []>} : vector<128x3xf32>, vector<3x32xf32>, vector<128x32xf32> -> vector<128x32xf32>
    %56 = arith.addf %50, %55 : vector<128x32xf32>
    %57 = vector.extract_strided_slice %6 {offsets = [0, 2, 2, 0], sizes = [1, 8, 16, 3], strides = [1, 1, 1, 1]} : vector<1x10x18x3xf32> to vector<1x8x16x3xf32>
    %58 = vector.shape_cast %57 : vector<1x8x16x3xf32> to vector<128x3xf32>
    %59 = vector.extract_strided_slice %7 {offsets = [8, 0, 0], sizes = [1, 3, 32], strides = [1, 1, 1]} : vector<9x3x32xf32> to vector<1x3x32xf32>
    %60 = vector.shape_cast %59 : vector<1x3x32xf32> to vector<3x32xf32>
    %cst_14 = arith.constant dense<0.000000e+00> : vector<128x32xf32>
    %61 = tpu.matmul %58, %60, %cst_14 {dimension_numbers = #tpu.dot_dimension_numbers<[1], [0], [0], [1], [0, 0, 1, 1], [], []>} : vector<128x3xf32>, vector<3x32xf32>, vector<128x32xf32> -> vector<128x32xf32>
    %62 = arith.addf %56, %61 : vector<128x32xf32>
    %c0_15 = arith.constant 0 : index
    %c0_16 = arith.constant 0 : index
    %63 = vector.load %arg4[%c0_15, %c0_16] : memref<1x32xf32, #tpu.memory_space<vmem>>, vector<1x32xf32>
    %64 = vector.broadcast %63 : vector<1x32xf32> to vector<128x32xf32>
    %65 = arith.addf %62, %64 : vector<128x32xf32>
    %cst_17 = arith.constant 0.000000e+00 : f32
    %66 = vector.broadcast %cst_17 : f32 to vector<128x32xf32>
    %67 = arith.maximumf %65, %66 : vector<128x32xf32>
    %c0_18 = arith.constant 0 : index
    %c0_19 = arith.constant 0 : index
    %68 = vector.load %arg8[%c0_18, %c0_19] : memref<1x32xf32, #tpu.memory_space<vmem>>, vector<1x32xf32>
    %69 = vector.shape_cast %67 : vector<128x32xf32> to vector<1x128x32xf32>
    %cst_20 = arith.constant dense<0.000000e+00> : vector<1x32xf32>
    %70 = vector.multi_reduction <add>, %69, %cst_20 [1] : vector<1x128x32xf32> to vector<1x32xf32>
    %71 = arith.addf %68, %70 : vector<1x32xf32>
    %c0_21 = arith.constant 0 : index
    %c0_22 = arith.constant 0 : index
    %72 = vector.load %arg8[%c0_21, %c0_22] : memref<1x32xf32, #tpu.memory_space<vmem>>, vector<1x32xf32>
    tpu.vector_store %arg8[%c0_21, %c0_22], %71 {strides = array<i32>} : memref<1x32xf32, #tpu.memory_space<vmem>>, vector<1x32xf32>,
    %c1_i32 = arith.constant 1 : i32
    %73 = arith.cmpi eq, %arg1, %c1_i32 : i32
    %74 = arith.extui %73 : i1 to i32
    %c0_i32_23 = arith.constant 0 : i32
    %75 = arith.cmpi ne, %74, %c0_i32_23 : i32
    scf.if %75 {
      %c0_24 = arith.constant 0 : index
      %c0_25 = arith.constant 0 : index
      %76 = vector.load %arg8[%c0_24, %c0_25] : memref<1x32xf32, #tpu.memory_space<vmem>>, vector<1x32xf32>
      %cst_26 = arith.constant 3.906250e-03 : f32
      %77 = vector.broadcast %cst_26 : f32 to vector<1x32xf32>
      %78 = arith.mulf %76, %77 : vector<1x32xf32>
      %c0_27 = arith.constant 0 : index
      %c0_28 = arith.constant 0 : index
      %79 = vector.load %arg5[%c0_27, %c0_28] : memref<32x2xf32, #tpu.memory_space<vmem>>, vector<32x2xf32>
      %cst_29 = arith.constant dense<0.000000e+00> : vector<1x2xf32>
      %80 = tpu.matmul %78, %79, %cst_29 {dimension_numbers = #tpu.dot_dimension_numbers<[1], [0], [0], [1], [0, 0, 1, 1], [], []>} : vector<1x32xf32>, vector<32x2xf32>, vector<1x2xf32> -> vector<1x2xf32>
      %c0_30 = arith.constant 0 : index
      %c0_31 = arith.constant 0 : index
      %81 = vector.load %arg6[%c0_30, %c0_31] : memref<1x2xf32, #tpu.memory_space<vmem>>, vector<1x2xf32>
      %82 = arith.addf %80, %81 : vector<1x2xf32>
      %83 = vector.extract_strided_slice %82 {offsets = [0, 0], sizes = [1, 1], strides = [1, 1]} : vector<1x2xf32> to vector<1x1xf32>
      %cst_32 = arith.constant 0.000000e+00 : f32
      %84 = vector.broadcast %cst_32 : f32 to vector<1x1xf32>
      %85 = arith.subf %84, %83 : vector<1x1xf32>
      %86 = math.exp %85 : vector<1x1xf32>
      %cst_33 = arith.constant 1.000000e+00 : f32
      %87 = vector.broadcast %cst_33 : f32 to vector<1x1xf32>
      %88 = arith.addf %87, %86 : vector<1x1xf32>
      %cst_34 = arith.constant 1.000000e+00 : f32
      %89 = vector.broadcast %cst_34 : f32 to vector<1x1xf32>
      %90 = arith.divf %89, %88 : vector<1x1xf32>
      %91 = vector.extract_strided_slice %82 {offsets = [0, 1], sizes = [1, 1], strides = [1, 1]} : vector<1x2xf32> to vector<1x1xf32>
      %92 = math.exp %91 : vector<1x1xf32>
      %93 = tpu.concatenate %90, %92 in 1 : vector<1x1xf32>, vector<1x1xf32> -> vector<1x2xf32>
      %94 = vector.shape_cast %93 : vector<1x2xf32> to vector<1x1x2xf32>
      %c0_35 = arith.constant 0 : index
      %c0_36 = arith.constant 0 : index
      %c0_37 = arith.constant 0 : index
      %95 = vector.load %arg7[%c0_35, %c0_36, %c0_37] : memref<1x1x2xf32, #tpu.memory_space<vmem>>, vector<1x1x2xf32>
      tpu.vector_store %arg7[%c0_35, %c0_36, %c0_37], %94 {strides = array<i32>} : memref<1x1x2xf32, #tpu.memory_space<vmem>>, vector<1x1x2xf32>,
    } else {
    }
    return
  }
  func.func @transform_0(%arg0: i32, %arg1: i32) -> (i32, i32, i32, i32) {
    %c0_i32 = arith.constant 0 : i32
    %c0_i32_0 = arith.constant 0 : i32
    %c0_i32_1 = arith.constant 0 : i32
    %c0_i32_2 = arith.constant 0 : i32
    return %arg0, %c0_i32, %c0_i32_0, %c0_i32_1 : i32, i32, i32, i32
  }
  func.func @transform_1(%arg0: i32, %arg1: i32) -> (i32, i32, i32) {
    %c0_i32 = arith.constant 0 : i32
    %c0_i32_0 = arith.constant 0 : i32
    %c0_i32_1 = arith.constant 0 : i32
    %c0_i32_2 = arith.constant 0 : i32
    return %c0_i32, %c0_i32_0, %c0_i32_1 : i32, i32, i32
  }
  func.func @transform_2(%arg0: i32, %arg1: i32) -> (i32, i32) {
    %c0_i32 = arith.constant 0 : i32
    %c0_i32_0 = arith.constant 0 : i32
    %c0_i32_1 = arith.constant 0 : i32
    return %c0_i32, %c0_i32_0 : i32, i32
  }
  func.func @transform_3(%arg0: i32, %arg1: i32) -> (i32, i32) {
    %c0_i32 = arith.constant 0 : i32
    %c0_i32_0 = arith.constant 0 : i32
    %c0_i32_1 = arith.constant 0 : i32
    return %c0_i32, %c0_i32_0 : i32, i32
  }
  func.func @transform_4(%arg0: i32, %arg1: i32) -> (i32, i32) {
    %c0_i32 = arith.constant 0 : i32
    %c0_i32_0 = arith.constant 0 : i32
    %c0_i32_1 = arith.constant 0 : i32
    return %c0_i32, %c0_i32_0 : i32, i32
  }
  func.func @transform_5(%arg0: i32, %arg1: i32) -> (i32, i32, i32) {
    %c0_i32 = arith.constant 0 : i32
    %c0_i32_0 = arith.constant 0 : i32
    %c0_i32_1 = arith.constant 0 : i32
    return %arg0, %c0_i32, %c0_i32_0 : i32, i32, i32
  }
}

</mosaic_0001>

<llo_original>
// kernel: tpu_custom_call.1
$region0: #{tpu_custom_call.1}
  #allocation0 [shape = 'u32[]', space=smem, size = 0x4, offset = 0x4, fixed_abs, tag = 'smem constant byte address 0x4 - core index']
  #allocation1 [shape = 'u32[72,128]{1,0:T(1,128)}', space=vmem, size = 0x9000, scoped, tag = 'internal scratch']
  #allocation2 [shape = 'f32[1,32]{1,0:T(1,128)}', space=vmem, size = 0x200, scoped, tag = 'scratch operand']
  %s0 = inlined_call_operand.vmem [shape: f32[2,18,18,3], index: 0, kind: input, shape index: {}]
  %s1 = inlined_call_operand.vmem [shape: f32[9,3,32], index: 1, kind: input, shape index: {}]
  %s2 = inlined_call_operand.vmem [shape: f32[1,32], index: 2, kind: input, shape index: {}]
  %s3 = inlined_call_operand.vmem [shape: f32[32,2], index: 3, kind: input, shape index: {}]
  %s4 = inlined_call_operand.vmem [shape: f32[1,2], index: 4, kind: input, shape index: {}]
  %s5 = inlined_call_operand.hbm [shape: f32[2,1,2], index: 5, kind: output, shape index: {}]
  %s6 = sld [smem:[#allocation0]]
  $region61: #{tpu_custom_call.1} parent=0
    _
  %s8 = ssub.s32 1, %s6
  %s9 = scalar_select 0, %s8, %s6
  $region1: #{tpu_custom_call.1} parent=0
    #allocation3 [shape = 'u8[1024]{0}', space=vmem, size = 0x400, scoped, tag = 'output window, operand 0']
    #allocation4 [shape = 's32[2]{0}', space=sflag, size = 0x8, scoped, tag = 'scoped memory for tpu_custom_call.1']
    %10 = vsyncpa [#allocation4], 0
    %s11 = scalar_lea.sflag [#allocation4], 1
    %12 = vsyncpa %s11, 0
    loop: start=0, step=1, limit=6
    $region2: #{tpu_custom_call.1} parent=1 // loop_pre_header
      _
    $region3: #{tpu_custom_call.1} parent=1 // loop_header
      %s14 = sphi 0, %s18
      %p15 = scmp.ge.s32.totalorder %s14, 6
      %s21 = sphi 0, %s33
      %s22 = sphi 0, %s29
      %s23 = sphi 0, %s21
      %s24 = sphi 0, %s22
      %s25 = sphi 0, %s23
      %s26 = sphi 0, %s24
      %s36 = sphi 0, %s38
      %s39 = sphi 0, %s36
      %s40 = sphi 0, %s39
      %s56 = sphi 0, %s40
      %s60 = sphi 0, %s60
      %s62 = sphi 0, %s60
      %s63 = sphi 0, %s62
      %s77 = sphi 0, %s63
      %s81 = sphi 0, %s81
      %s83 = sphi 0, %s81
      %s84 = sphi 0, %s83
      %s98 = sphi 0, %s84
      %s102 = sphi 0, %s102
      %s104 = sphi 0, %s102
      %s105 = sphi 0, %s104
      %s119 = sphi 0, %s105
      %s123 = sphi 0, %s123
      %s125 = sphi 0, %s123
      %s126 = sphi 0, %s125
      %s140 = sphi 0, %s126
      %s146 = sphi 0, %s148
      %s149 = sphi 0, %s146
      %s150 = sphi 0, %s149
      %s166 = sphi 0, %s150
    $region4: #{tpu_custom_call.1} parent=1 // loop_header_branch
      %17 = sbr.rel (%p15) target = $region8
    $region5: #{tpu_custom_call.1} parent=1 // loop_body
      %s19 = ssub.s32 %s14, 1
      %s20 = ssub.s32 %s14, 2
      %s27 = sadd.s32 1, %s22
      %p28 = scmp.ge.s32.totalorder %s27, 2
      %s29 = scalar_select %p28, 0, %s27
      %s30 = sadd.s32 1, %s21
      %s31 = scalar_select %p28, %s30, %s21
      %p32 = scmp.ge.s32.totalorder %s31, 2
      %s33 = scalar_select %p32, 0, %s31
      %s34 = ssub.s32 %s21, %s33
      %p35 = scmp.eq.s32.totalorder %s34, 0
      %s37 = sadd.s32 %s36, 1
      %s38 = scalar_select %p35, %s36, %s37
      %p41 = pneg %p35
      %p42 = scmp.eq.s32.totalorder %s14, 3
      %p43 = por %p41, %p42
      %p44 = scmp.ne.s32.totalorder %s36, %s39
      %p45 = scmp.eq.s32.totalorder %s14, 0
      %p46 = por %p44, %p45
      %p47 = scmp.ne.s32.totalorder %s36, %s39
      %p48 = scmp.eq.s32.totalorder %s19, 3
      %p49 = por %p47, %p48
      %p50 = scmp.ne.s32.totalorder %s39, %s40
      %p51 = scmp.eq.s32.totalorder %s19, 0
      %p52 = por %p50, %p51
      %p53 = scmp.ne.s32.totalorder %s39, %s40
      %p54 = scmp.eq.s32.totalorder %s20, 3
      %p55 = por %p53, %p54
      %p57 = scmp.ne.s32.totalorder %s40, %s56
      %p58 = scmp.eq.s32.totalorder %s20, 0
      %p59 = por %p57, %p58
      %s61 = sadd.s32 %s60, 1
      %p64 = scmp.eq.s32.totalorder %s14, 3
      %p65 = scmp.ne.s32.totalorder %s60, %s62
      %p66 = scmp.eq.s32.totalorder %s14, 0
      %p67 = por %p65, %p66
      %p68 = scmp.ne.s32.totalorder %s60, %s62
      %p69 = scmp.eq.s32.totalorder %s19, 3
      %p70 = por %p68, %p69
      %p71 = scmp.ne.s32.totalorder %s62, %s63
      %p72 = scmp.eq.s32.totalorder %s19, 0
      %p73 = por %p71, %p72
      %p74 = scmp.ne.s32.totalorder %s62, %s63
      %p75 = scmp.eq.s32.totalorder %s20, 3
      %p76 = por %p74, %p75
      %p78 = scmp.ne.s32.totalorder %s63, %s77
      %p79 = scmp.eq.s32.totalorder %s20, 0
      %p80 = por %p78, %p79
      %s82 = sadd.s32 %s81, 1
      %p85 = scmp.eq.s32.totalorder %s14, 3
      %p86 = scmp.ne.s32.totalorder %s81, %s83
      %p87 = scmp.eq.s32.totalorder %s14, 0
      %p88 = por %p86, %p87
      %p89 = scmp.ne.s32.totalorder %s81, %s83
      %p90 = scmp.eq.s32.totalorder %s19, 3
      %p91 = por %p89, %p90
      %p92 = scmp.ne.s32.totalorder %s83, %s84
      %p93 = scmp.eq.s32.totalorder %s19, 0
      %p94 = por %p92, %p93
      %p95 = scmp.ne.s32.totalorder %s83, %s84
      %p96 = scmp.eq.s32.totalorder %s20, 3
      %p97 = por %p95, %p96
      %p99 = scmp.ne.s32.totalorder %s84, %s98
      %p100 = scmp.eq.s32.totalorder %s20, 0
      %p101 = por %p99, %p100
      %s103 = sadd.s32 %s102, 1
      %p106 = scmp.eq.s32.totalorder %s14, 3
      %p107 = scmp.ne.s32.totalorder %s102, %s104
      %p108 = scmp.eq.s32.totalorder %s14, 0
      %p109 = por %p107, %p108
      %p110 = scmp.ne.s32.totalorder %s102, %s104
      %p111 = scmp.eq.s32.totalorder %s19, 3
      %p112 = por %p110, %p111
      %p113 = scmp.ne.s32.totalorder %s104, %s105
      %p114 = scmp.eq.s32.totalorder %s19, 0
      %p115 = por %p113, %p114
      %p116 = scmp.ne.s32.totalorder %s104, %s105
      %p117 = scmp.eq.s32.totalorder %s20, 3
      %p118 = por %p116, %p117
      %p120 = scmp.ne.s32.totalorder %s105, %s119
      %p121 = scmp.eq.s32.totalorder %s20, 0
      %p122 = por %p120, %p121
      %s124 = sadd.s32 %s123, 1
      %p127 = scmp.eq.s32.totalorder %s14, 3
      %p128 = scmp.ne.s32.totalorder %s123, %s125
      %p129 = scmp.eq.s32.totalorder %s14, 0
      %p130 = por %p128, %p129
      %p131 = scmp.ne.s32.totalorder %s123, %s125
      %p132 = scmp.eq.s32.totalorder %s19, 3
      %p133 = por %p131, %p132
      %p134 = scmp.ne.s32.totalorder %s125, %s126
      %p135 = scmp.eq.s32.totalorder %s19, 0
      %p136 = por %p134, %p135
      %p137 = scmp.ne.s32.totalorder %s125, %s126
      %p138 = scmp.eq.s32.totalorder %s20, 3
      %p139 = por %p137, %p138
      %p141 = scmp.ne.s32.totalorder %s126, %s140
      %p142 = scmp.eq.s32.totalorder %s20, 0
      %p143 = por %p141, %p142
      %s144 = ssub.s32 %s21, %s33
      %p145 = scmp.eq.s32.totalorder %s144, 0
      %s147 = sadd.s32 %s146, 1
      %s148 = scalar_select %p145, %s146, %s147
      %p151 = pneg %p145
      %p152 = scmp.eq.s32.totalorder %s14, 3
      %p153 = por %p151, %p152
      %p154 = scmp.ne.s32.totalorder %s146, %s149
      %p155 = scmp.eq.s32.totalorder %s14, 0
      %p156 = por %p154, %p155
      %p157 = scmp.ne.s32.totalorder %s146, %s149
      %p158 = scmp.eq.s32.totalorder %s19, 3
      %p159 = por %p157, %p158
      %p160 = scmp.ne.s32.totalorder %s149, %s150
      %p161 = scmp.eq.s32.totalorder %s19, 0
      %p162 = por %p160, %p161
      %p163 = scmp.ne.s32.totalorder %s149, %s150
      %p164 = scmp.eq.s32.totalorder %s20, 3
      %p165 = por %p163, %p164
      %p167 = scmp.ne.s32.totalorder %s150, %s166
      %p168 = scmp.eq.s32.totalorder %s20, 0
      %p169 = por %p167, %p168
      %p170 = scmp.le.s32.totalorder 1, %s14
      %p171 = scmp.lt.s32.totalorder %s14, 5
      %p172 = pnand %p170, %p171
      %p173 = pneg %p172
      // Predicated region
      $region9: #{tpu_custom_call.1} parent=5 // pred_check
        _
      $region10: #{tpu_custom_call.1} parent=5 // pred_check_branch
        %175 = sbr.rel (%p172) target = $region12
      $region11: #{tpu_custom_call.1} parent=5 // pred_region
        %s176 = ssub.s32 %s14, 1
        // Predicated region
        $region13: #{tpu_custom_call.1} parent=11 // pred_check
          %p177 = pneg %p73
        $region14: #{tpu_custom_call.1} parent=11 // pred_check_branch
          %179 = sbr.rel (%p177) target = $region16
        $region15: #{tpu_custom_call.1} parent=11 // pred_region
          _
        $region16: #{tpu_custom_call.1} parent=11 // pred_fallthru
          _
        // Predicated region
        $region17: #{tpu_custom_call.1} parent=11 // pred_check
          %p180 = pneg %p94
        $region18: #{tpu_custom_call.1} parent=11 // pred_check_branch
          %182 = sbr.rel (%p180) target = $region20
        $region19: #{tpu_custom_call.1} parent=11 // pred_region
          _
        $region20: #{tpu_custom_call.1} parent=11 // pred_fallthru
          _
        // Predicated region
        $region21: #{tpu_custom_call.1} parent=11 // pred_check
          %p183 = pneg %p115
        $region22: #{tpu_custom_call.1} parent=11 // pred_check_branch
          %185 = sbr.rel (%p183) target = $region24
        $region23: #{tpu_custom_call.1} parent=11 // pred_region
          _
        $region24: #{tpu_custom_call.1} parent=11 // pred_fallthru
          _
        // Predicated region
        $region25: #{tpu_custom_call.1} parent=11 // pred_check
          %p186 = pneg %p136
        $region26: #{tpu_custom_call.1} parent=11 // pred_check_branch
          %188 = sbr.rel (%p186) target = $region28
        $region27: #{tpu_custom_call.1} parent=11 // pred_region
          _
        $region28: #{tpu_custom_call.1} parent=11 // pred_fallthru
          _
      $region12: #{tpu_custom_call.1} parent=5 // pred_fallthru
        _
      %p189 = scmp.lt.s32.totalorder %s14, 4
      // Predicated region
      $region29: #{tpu_custom_call.1} parent=5 // pred_check
        %p190 = pneg %p189
      $region30: #{tpu_custom_call.1} parent=5 // pred_check_branch
        %192 = sbr.rel (%p190) target = $region32
      $region31: #{tpu_custom_call.1} parent=5 // pred_region
        // Predicated region
        $region33: #{tpu_custom_call.1} parent=31 // pred_check
          %p193 = pneg %p46
        $region34: #{tpu_custom_call.1} parent=31 // pred_check_branch
          %195 = sbr.rel (%p193) target = $region36
        $region35: #{tpu_custom_call.1} parent=31 // pred_region
          %p196 = scmp.lt.s32.totalorder %s21, 1
          %s197 = scalar_select %p196, %s21, 1
          %s198 = smul.addr %s197, 54
          %s199 = smul.addr %s198, 8
          %s200 = scalar_lea.vmem %s0, %s199
        $region36: #{tpu_custom_call.1} parent=31 // pred_fallthru
          _
      $region32: #{tpu_custom_call.1} parent=5 // pred_fallthru
        _
      %p201 = scmp.le.s32.totalorder 1, %s14
      %p202 = scmp.lt.s32.totalorder %s14, 5
      %p203 = pnand %p201, %p202
      %p204 = pneg %p203
      // Predicated region
      $region37: #{tpu_custom_call.1} parent=5 // pred_check
        _
      $region38: #{tpu_custom_call.1} parent=5 // pred_check_branch
        %206 = sbr.rel (%p203) target = $region40
      $region39: #{tpu_custom_call.1} parent=5 // pred_region
        %s207 = ssub.s32 %s14, 1
        %p208 = scmp.lt.s32.totalorder %s23, 1
        %s209 = scalar_select %p208, %s23, 1
        %s210 = smul.addr %s209, 54
        %s211 = smul.addr %s210, 8
        %s212 = scalar_lea.vmem %s0, %s211
        %p213 = pneg %p52
        %p214 = pneg %p49
        %p215 = pneg %p73
        %p216 = pneg %p70
        %p217 = pneg %p94
        %p218 = pneg %p91
        %p219 = pneg %p115
        %p220 = pneg %p112
        %p221 = pneg %p136
        %p222 = pneg %p133
        %p223 = pneg %p162
        %p224 = pneg %p159
        %s225 = sand.u32 %s149, 1
        %s226 = scalar_lea.sflag [#allocation4], %s225
        %s227 = sand.u32 %s149, 1
        %s228 = scalar_lea.vmem [#allocation3], %s227
        %p229 = scmp.lt.s32.totalorder %s23, 1
        %s230 = scalar_select %p229, %s23, 1
        %s231 = smul.addr %s230, 54
        %s232 = smul.addr %s231, 8
        %s233 = scalar_lea.vmem %s0, %s232
        %p234 = scmp.eq.s32.totalorder %s24, 0
        // Predicated region
        $region41: #{tpu_custom_call.1} parent=39 // pred_check
          %p235 = pneg %p234
        $region42: #{tpu_custom_call.1} parent=39 // pred_check_branch
          %237 = sbr.rel (%p235) target = $region44
        $region43: #{tpu_custom_call.1} parent=39 // pred_region
          %vm238 = vcmask 253952
          %239 = vst.msk [vmem:[#allocation2] sm:$0x1] %vm238, 0.0
        $region44: #{tpu_custom_call.1} parent=39 // pred_fallthru
          _
        %s240 = smul.u32 %s24, 8
        %s241 = smul.u32 %s240, 24
        %s242 = scalar_lea.vmem %s233, %s241
        %v243 = vld [vmem:[%s242] sm:$0xff]
        %v244 = vld [vmem:[%s242 + $0x8] sm:$0xff]
        %v245 = vld [vmem:[%s242 + $0x10] sm:$0x3]
        %v246 = vld [vmem:[%s242 + $0x18] sm:$0xff]
        %v247 = vld [vmem:[%s242 + $0x20] sm:$0xff]
        %v248 = vld [vmem:[%s242 + $0x28] sm:$0x3]
        %v249 = vld [vmem:[%s242 + $0x30] sm:$0xff]
        %v250 = vld [vmem:[%s242 + $0x38] sm:$0xff]
        %v251 = vld [vmem:[%s242 + $0x40] sm:$0x3]
        %v252 = vld [vmem:[%s242 + $0x48] sm:$0xff]
        %v253 = vld [vmem:[%s242 + $0x50] sm:$0xff]
        %v254 = vld [vmem:[%s242 + $0x58] sm:$0x3]
        %v255 = vld [vmem:[%s242 + $0x60] sm:$0xff]
        %v256 = vld [vmem:[%s242 + $0x68] sm:$0xff]
        %v257 = vld [vmem:[%s242 + $0x70] sm:$0x3]
        %v258 = vld [vmem:[%s242 + $0x78] sm:$0xff]
        %v259 = vld [vmem:[%s242 + $0x80] sm:$0xff]
        %v260 = vld [vmem:[%s242 + $0x88] sm:$0x3]
        %v261 = vld [vmem:[%s242 + $0x90] sm:$0xff]
        %v262 = vld [vmem:[%s242 + $0x98] sm:$0xff]
        %v263 = vld [vmem:[%s242 + $0xa0] sm:$0x3]
        %v264 = vld [vmem:[%s242 + $0xa8] sm:$0xff]
        %v265 = vld [vmem:[%s242 + $0xb0] sm:$0xff]
        %v266 = vld [vmem:[%s242 + $0xb8] sm:$0x3]
        %v267 = vld [vmem:[%s242 + $0xc0] sm:$0xff]
        %v268 = vld [vmem:[%s242 + $0xc8] sm:$0xff]
        %v269 = vld [vmem:[%s242 + $0xd0] sm:$0x3]
        %v270 = vld [vmem:[%s242 + $0xd8] sm:$0xff]
        %v271 = vld [vmem:[%s242 + $0xe0] sm:$0xff]
        %v272 = vld [vmem:[%s242 + $0xe8] sm:$0x3]
        %v273 = vld [vmem:[%s1] sm:$0x7]
        %v274 = vld [vmem:[%s1 + $0x4] sm:$0x7]
        %v275 = vld [vmem:[%s1 + $0x8] sm:$0x7]
        %v276 = vld [vmem:[%s1 + $0xc] sm:$0x7]
        %v277 = vld [vmem:[%s1 + $0x10] sm:$0x7]
        %v278 = vld [vmem:[%s1 + $0x14] sm:$0x7]
        %v279 = vld [vmem:[%s1 + $0x18] sm:$0x7]
        %v280 = vld [vmem:[%s1 + $0x1c] sm:$0x7]
        %v281 = vld [vmem:[%s1 + $0x20] sm:$0x7]
        %vm306 = vcmask 1046528
        %v307 = vrot.slane %v243, 1
        %v308 = vrot.slane %v244, 1
        %v309 = vsel %vm306, %v307, %v308
        %v310 = vrot.slane %v245, 1
        %v311 = vsel %vm306, %v308, %v310
        %v312 = vrot.slane %v246, 1
        %v313 = vrot.slane %v247, 1
        %v314 = vsel %vm306, %v312, %v313
        %v315 = vrot.slane %v248, 1
        %v316 = vsel %vm306, %v313, %v315
        %v317 = vrot.slane %v249, 1
        %v318 = vrot.slane %v250, 1
        %v319 = vsel %vm306, %v317, %v318
        %v320 = vrot.slane %v251, 1
        %v321 = vsel %vm306, %v318, %v320
        %v322 = vrot.slane %v252, 1
        %v323 = vrot.slane %v253, 1
        %v324 = vsel %vm306, %v322, %v323
        %v325 = vrot.slane %v254, 1
        %v326 = vsel %vm306, %v323, %v325
        %v327 = vrot.slane %v255, 1
        %v328 = vrot.slane %v256, 1
        %v329 = vsel %vm306, %v327, %v328
        %v330 = vrot.slane %v257, 1
        %v331 = vsel %vm306, %v328, %v330
        %v332 = vrot.slane %v258, 1
        %v333 = vrot.slane %v259, 1
        %v334 = vsel %vm306, %v332, %v333
        %v335 = vrot.slane %v260, 1
        %v336 = vsel %vm306, %v333, %v335
        %v337 = vrot.slane %v261, 1
        %v338 = vrot.slane %v262, 1
        %v339 = vsel %vm306, %v337, %v338
        %v340 = vrot.slane %v263, 1
        %v341 = vsel %vm306, %v338, %v340
        %v342 = vrot.slane %v264, 1
        %v343 = vrot.slane %v265, 1
        %v344 = vsel %vm306, %v342, %v343
        %v345 = vrot.slane %v266, 1
        %v346 = vsel %vm306, %v343, %v345
        %vm347 = vcmask 23552
        %v348 = vsel %vm347, %v309, 0
        %v350 = vsel %vm347, %v311, 0
        %v352 = vsel %vm347, %v314, 0
        %v354 = vsel %vm347, %v316, 0
        %v356 = vsel %vm347, %v319, 0
        %v358 = vsel %vm347, %v321, 0
        %v360 = vsel %vm347, %v324, 0
        %v362 = vsel %vm347, %v326, 0
        %v364 = vsel %vm347, %v329, 0
        %v366 = vsel %vm347, %v331, 0
        %v368 = vsel %vm347, %v334, 0
        %v370 = vsel %vm347, %v336, 0
        %v372 = vsel %vm347, %v339, 0
        %v374 = vsel %vm347, %v341, 0
        %v376 = vsel %vm347, %v344, 0
        %v378 = vsel %vm347, %v346, 0
        %vm380 = vcmask 1042432
        %v382 = vsel %vm380, %v274, 0
        %384 = vmatpush.msra.mxu0 0.0
        %385 = vmatpush.msra.mxu0 0.0
        %386 = vmatpush.msra.mxu0 0.0
        %387 = vmatpush.msra.mxu0 0.0
        %388 = vmatpush.msra.mxu0 0.0
        %389 = vmatpush.msra.mxu0 0.0
        %390 = vmatpush.msra.mxu0 0.0
        %391 = vmatpush.msra.mxu0 0.0
        %392 = vmatpush.msra.mxu0 0.0
        %393 = vmatpush.msra.mxu0 0.0
        %394 = vmatpush.msra.mxu0 0.0
        %395 = vmatpush.msra.mxu0 0.0
        %396 = vmatpush.msra.mxu0 0.0
        %397 = vmatpush.msra.mxu0 0.0
        %398 = vmatpush.msra.mxu0 0.0
        %399 = vmatpush.msra.mxu0 %v382
        %400 = vmatmul.f32.gmra.mxu0 %v348
        %v401 = vpop.f32.mrf.mxu0
        %v402 = vadd.f32 0.0, %v401
        %403 = vmatmul.f32.gmra.mxu0 %v350
        %v404 = vpop.f32.mrf.mxu0
        %v405 = vadd.f32 0.0, %v404
        %406 = vmatmul.f32.gmra.mxu0 %v352
        %v407 = vpop.f32.mrf.mxu0
        %v408 = vadd.f32 0.0, %v407
        %409 = vmatmul.f32.gmra.mxu0 %v354
        %v410 = vpop.f32.mrf.mxu0
        %v411 = vadd.f32 0.0, %v410
        %412 = vmatmul.f32.gmra.mxu0 %v356
        %v413 = vpop.f32.mrf.mxu0
        %v414 = vadd.f32 0.0, %v413
        %415 = vmatmul.f32.gmra.mxu0 %v358
        %v416 = vpop.f32.mrf.mxu0
        %v417 = vadd.f32 0.0, %v416
        %418 = vmatmul.f32.gmra.mxu0 %v360
        %v419 = vpop.f32.mrf.mxu0
        %v420 = vadd.f32 0.0, %v419
        %421 = vmatmul.f32.gmra.mxu0 %v362
        %v422 = vpop.f32.mrf.mxu0
        %v423 = vadd.f32 0.0, %v422
        %424 = vmatmul.f32.gmra.mxu0 %v364
        %v425 = vpop.f32.mrf.mxu0
        %v426 = vadd.f32 0.0, %v425
        %427 = vmatmul.f32.gmra.mxu0 %v366
        %v428 = vpop.f32.mrf.mxu0
        %v429 = vadd.f32 0.0, %v428
        %430 = vmatmul.f32.gmra.mxu0 %v368
        %v431 = vpop.f32.mrf.mxu0
        %v432 = vadd.f32 0.0, %v431
        %433 = vmatmul.f32.gmra.mxu0 %v370
        %v434 = vpop.f32.mrf.mxu0
        %v435 = vadd.f32 0.0, %v434
        %436 = vmatmul.f32.gmra.mxu0 %v372
        %v437 = vpop.f32.mrf.mxu0
        %v438 = vadd.f32 0.0, %v437
        %439 = vmatmul.f32.gmra.mxu0 %v374
        %v440 = vpop.f32.mrf.mxu0
        %v441 = vadd.f32 0.0, %v440
        %442 = vmatmul.f32.gmra.mxu0 %v376
        %v443 = vpop.f32.mrf.mxu0
        %v444 = vadd.f32 0.0, %v443
        %445 = vmatmul.f32.gmra.mxu0 %v378
        %v446 = vpop.f32.mrf.mxu0
        %v447 = vadd.f32 0.0, %v446
        %448 = vdwg.mxu0
        %v449 = vsel %vm347, %v243, 0
        %v451 = vsel %vm347, %v244, 0
        %v453 = vsel %vm347, %v246, 0
        %v455 = vsel %vm347, %v247, 0
        %v457 = vsel %vm347, %v249, 0
        %v459 = vsel %vm347, %v250, 0
        %v461 = vsel %vm347, %v252, 0
        %v463 = vsel %vm347, %v253, 0
        %v465 = vsel %vm347, %v255, 0
        %v467 = vsel %vm347, %v256, 0
        %v469 = vsel %vm347, %v258, 0
        %v471 = vsel %vm347, %v259, 0
        %v473 = vsel %vm347, %v261, 0
        %v475 = vsel %vm347, %v262, 0
        %v477 = vsel %vm347, %v264, 0
        %v479 = vsel %vm347, %v265, 0
        %v482 = vsel %vm380, %v273, 0
        %484 = vmatpush.msra.mxu0 0.0
        %485 = vmatpush.msra.mxu0 0.0
        %486 = vmatpush.msra.mxu0 0.0
        %487 = vmatpush.msra.mxu0 0.0
        %488 = vmatpush.msra.mxu0 0.0
        %489 = vmatpush.msra.mxu0 0.0
        %490 = vmatpush.msra.mxu0 0.0
        %491 = vmatpush.msra.mxu0 0.0
        %492 = vmatpush.msra.mxu0 0.0
        %493 = vmatpush.msra.mxu0 0.0
        %494 = vmatpush.msra.mxu0 0.0
        %495 = vmatpush.msra.mxu0 0.0
        %496 = vmatpush.msra.mxu0 0.0
        %497 = vmatpush.msra.mxu0 0.0
        %498 = vmatpush.msra.mxu0 0.0
        %499 = vmatpush.msra.mxu0 %v482
        %500 = vmatmul.f32.gmra.mxu0 %v449
        %v501 = vpop.f32.mrf.mxu0
        %v502 = vadd.f32 %v402, %v501
        %503 = vmatmul.f32.gmra.mxu0 %v451
        %v504 = vpop.f32.mrf.mxu0
        %v505 = vadd.f32 %v405, %v504
        %506 = vmatmul.f32.gmra.mxu0 %v453
        %v507 = vpop.f32.mrf.mxu0
        %v508 = vadd.f32 %v408, %v507
        %509 = vmatmul.f32.gmra.mxu0 %v455
        %v510 = vpop.f32.mrf.mxu0
        %v511 = vadd.f32 %v411, %v510
        %512 = vmatmul.f32.gmra.mxu0 %v457
        %v513 = vpop.f32.mrf.mxu0
        %v514 = vadd.f32 %v414, %v513
        %515 = vmatmul.f32.gmra.mxu0 %v459
        %v516 = vpop.f32.mrf.mxu0
        %v517 = vadd.f32 %v417, %v516
        %518 = vmatmul.f32.gmra.mxu0 %v461
        %v519 = vpop.f32.mrf.mxu0
        %v520 = vadd.f32 %v420, %v519
        %521 = vmatmul.f32.gmra.mxu0 %v463
        %v522 = vpop.f32.mrf.mxu0
        %v523 = vadd.f32 %v423, %v522
        %524 = vmatmul.f32.gmra.mxu0 %v465
        %v525 = vpop.f32.mrf.mxu0
        %v526 = vadd.f32 %v426, %v525
        %527 = vmatmul.f32.gmra.mxu0 %v467
        %v528 = vpop.f32.mrf.mxu0
        %v529 = vadd.f32 %v429, %v528
        %530 = vmatmul.f32.gmra.mxu0 %v469
        %v531 = vpop.f32.mrf.mxu0
        %v532 = vadd.f32 %v432, %v531
        %533 = vmatmul.f32.gmra.mxu0 %v471
        %v534 = vpop.f32.mrf.mxu0
        %v535 = vadd.f32 %v435, %v534
        %536 = vmatmul.f32.gmra.mxu0 %v473
        %v537 = vpop.f32.mrf.mxu0
        %v538 = vadd.f32 %v438, %v537
        %539 = vmatmul.f32.gmra.mxu0 %v475
        %v540 = vpop.f32.mrf.mxu0
        %v541 = vadd.f32 %v441, %v540
        %542 = vmatmul.f32.gmra.mxu0 %v477
        %v543 = vpop.f32.mrf.mxu0
        %v544 = vadd.f32 %v444, %v543
        %545 = vmatmul.f32.gmra.mxu0 %v479
        %v546 = vpop.f32.mrf.mxu0
        %v547 = vadd.f32 %v447, %v546
        %548 = vdwg.mxu0
        %vm549 = vcmask 1045504
        %v550 = vrot.slane %v243, 2
        %v551 = vrot.slane %v244, 2
        %v552 = vsel %vm549, %v550, %v551
        %v553 = vrot.slane %v245, 2
        %v554 = vsel %vm549, %v551, %v553
        %v555 = vrot.slane %v246, 2
        %v556 = vrot.slane %v247, 2
        %v557 = vsel %vm549, %v555, %v556
        %v558 = vrot.slane %v248, 2
        %v559 = vsel %vm549, %v556, %v558
        %v560 = vrot.slane %v249, 2
        %v561 = vrot.slane %v250, 2
        %v562 = vsel %vm549, %v560, %v561
        %v563 = vrot.slane %v251, 2
        %v564 = vsel %vm549, %v561, %v563
        %v565 = vrot.slane %v252, 2
        %v566 = vrot.slane %v253, 2
        %v567 = vsel %vm549, %v565, %v566
        %v568 = vrot.slane %v254, 2
        %v569 = vsel %vm549, %v566, %v568
        %v570 = vrot.slane %v255, 2
        %v571 = vrot.slane %v256, 2
        %v572 = vsel %vm549, %v570, %v571
        %v573 = vrot.slane %v257, 2
        %v574 = vsel %vm549, %v571, %v573
        %v575 = vrot.slane %v258, 2
        %v576 = vrot.slane %v259, 2
        %v577 = vsel %vm549, %v575, %v576
        %v578 = vrot.slane %v260, 2
        %v579 = vsel %vm549, %v576, %v578
        %v580 = vrot.slane %v261, 2
        %v581 = vrot.slane %v262, 2
        %v582 = vsel %vm549, %v580, %v581
        %v583 = vrot.slane %v263, 2
        %v584 = vsel %vm549, %v581, %v583
        %v585 = vrot.slane %v264, 2
        %v586 = vrot.slane %v265, 2
        %v587 = vsel %vm549, %v585, %v586
        %v588 = vrot.slane %v266, 2
        %v589 = vsel %vm549, %v586, %v588
        %v590 = vsel %vm347, %v552, 0
        %v592 = vsel %vm347, %v554, 0
        %v594 = vsel %vm347, %v557, 0
        %v596 = vsel %vm347, %v559, 0
        %v598 = vsel %vm347, %v562, 0
        %v600 = vsel %vm347, %v564, 0
        %v602 = vsel %vm347, %v567, 0
        %v604 = vsel %vm347, %v569, 0
        %v606 = vsel %vm347, %v572, 0
        %v608 = vsel %vm347, %v574, 0
        %v610 = vsel %vm347, %v577, 0
        %v612 = vsel %vm347, %v579, 0
        %v614 = vsel %vm347, %v582, 0
        %v616 = vsel %vm347, %v584, 0
        %v618 = vsel %vm347, %v587, 0
        %v620 = vsel %vm347, %v589, 0
        %v623 = vsel %vm380, %v275, 0
        %625 = vmatpush.msra.mxu0 0.0
        %626 = vmatpush.msra.mxu0 0.0
        %627 = vmatpush.msra.mxu0 0.0
        %628 = vmatpush.msra.mxu0 0.0
        %629 = vmatpush.msra.mxu0 0.0
        %630 = vmatpush.msra.mxu0 0.0
        %631 = vmatpush.msra.mxu0 0.0
        %632 = vmatpush.msra.mxu0 0.0
        %633 = vmatpush.msra.mxu0 0.0
        %634 = vmatpush.msra.mxu0 0.0
        %635 = vmatpush.msra.mxu0 0.0
        %636 = vmatpush.msra.mxu0 0.0
        %637 = vmatpush.msra.mxu0 0.0
        %638 = vmatpush.msra.mxu0 0.0
        %639 = vmatpush.msra.mxu0 0.0
        %640 = vmatpush.msra.mxu0 %v623
        %641 = vmatmul.f32.gmra.mxu0 %v590
        %v642 = vpop.f32.mrf.mxu0
        %v643 = vadd.f32 0.0, %v642
        %644 = vmatmul.f32.gmra.mxu0 %v592
        %v645 = vpop.f32.mrf.mxu0
        %v646 = vadd.f32 0.0, %v645
        %647 = vmatmul.f32.gmra.mxu0 %v594
        %v648 = vpop.f32.mrf.mxu0
        %v649 = vadd.f32 0.0, %v648
        %650 = vmatmul.f32.gmra.mxu0 %v596
        %v651 = vpop.f32.mrf.mxu0
        %v652 = vadd.f32 0.0, %v651
        %653 = vmatmul.f32.gmra.mxu0 %v598
        %v654 = vpop.f32.mrf.mxu0
        %v655 = vadd.f32 0.0, %v654
        %656 = vmatmul.f32.gmra.mxu0 %v600
        %v657 = vpop.f32.mrf.mxu0
        %v658 = vadd.f32 0.0, %v657
        %659 = vmatmul.f32.gmra.mxu0 %v602
        %v660 = vpop.f32.mrf.mxu0
        %v661 = vadd.f32 0.0, %v660
        %662 = vmatmul.f32.gmra.mxu0 %v604
        %v663 = vpop.f32.mrf.mxu0
        %v664 = vadd.f32 0.0, %v663
        %665 = vmatmul.f32.gmra.mxu0 %v606
        %v666 = vpop.f32.mrf.mxu0
        %v667 = vadd.f32 0.0, %v666
        %668 = vmatmul.f32.gmra.mxu0 %v608
        %v669 = vpop.f32.mrf.mxu0
        %v670 = vadd.f32 0.0, %v669
        %671 = vmatmul.f32.gmra.mxu0 %v610
        %v672 = vpop.f32.mrf.mxu0
        %v673 = vadd.f32 0.0, %v672
        %674 = vmatmul.f32.gmra.mxu0 %v612
        %v675 = vpop.f32.mrf.mxu0
        %v676 = vadd.f32 0.0, %v675
        %677 = vmatmul.f32.gmra.mxu0 %v614
        %v678 = vpop.f32.mrf.mxu0
        %v679 = vadd.f32 0.0, %v678
        %680 = vmatmul.f32.gmra.mxu0 %v616
        %v681 = vpop.f32.mrf.mxu0
        %v682 = vadd.f32 0.0, %v681
        %683 = vmatmul.f32.gmra.mxu0 %v618
        %v684 = vpop.f32.mrf.mxu0
        %v685 = vadd.f32 0.0, %v684
        %686 = vmatmul.f32.gmra.mxu0 %v620
        %v687 = vpop.f32.mrf.mxu0
        %v688 = vadd.f32 0.0, %v687
        %689 = vdwg.mxu0
        %v690 = vadd.f32 %v502, %v643
        %v691 = vadd.f32 %v505, %v646
        %v692 = vadd.f32 %v508, %v649
        %v693 = vadd.f32 %v511, %v652
        %v694 = vadd.f32 %v514, %v655
        %v695 = vadd.f32 %v517, %v658
        %v696 = vadd.f32 %v520, %v661
        %v697 = vadd.f32 %v523, %v664
        %v698 = vadd.f32 %v526, %v667
        %v699 = vadd.f32 %v529, %v670
        %v700 = vadd.f32 %v532, %v673
        %v701 = vadd.f32 %v535, %v676
        %v702 = vadd.f32 %v538, %v679
        %v703 = vadd.f32 %v541, %v682
        %v704 = vadd.f32 %v544, %v685
        %v705 = vadd.f32 %v547, %v688
        %v707 = vsel %vm347, %v267, 0
        %v710 = vsel %vm347, %v268, 0
        %v713 = vsel %vm380, %v276, 0
        %715 = vmatpush.msra.mxu0 0.0
        %716 = vmatpush.msra.mxu0 0.0
        %717 = vmatpush.msra.mxu0 0.0
        %718 = vmatpush.msra.mxu0 0.0
        %719 = vmatpush.msra.mxu0 0.0
        %720 = vmatpush.msra.mxu0 0.0
        %721 = vmatpush.msra.mxu0 0.0
        %722 = vmatpush.msra.mxu0 0.0
        %723 = vmatpush.msra.mxu0 0.0
        %724 = vmatpush.msra.mxu0 0.0
        %725 = vmatpush.msra.mxu0 0.0
        %726 = vmatpush.msra.mxu0 0.0
        %727 = vmatpush.msra.mxu0 0.0
        %728 = vmatpush.msra.mxu0 0.0
        %729 = vmatpush.msra.mxu0 0.0
        %730 = vmatpush.msra.mxu0 %v713
        %731 = vmatmul.f32.gmra.mxu0 %v453
        %v732 = vpop.f32.mrf.mxu0
        %v733 = vadd.f32 0.0, %v732
        %734 = vmatmul.f32.gmra.mxu0 %v455
        %v735 = vpop.f32.mrf.mxu0
        %v736 = vadd.f32 0.0, %v735
        %737 = vmatmul.f32.gmra.mxu0 %v457
        %v738 = vpop.f32.mrf.mxu0
        %v739 = vadd.f32 0.0, %v738
        %740 = vmatmul.f32.gmra.mxu0 %v459
        %v741 = vpop.f32.mrf.mxu0
        %v742 = vadd.f32 0.0, %v741
        %743 = vmatmul.f32.gmra.mxu0 %v461
        %v744 = vpop.f32.mrf.mxu0
        %v745 = vadd.f32 0.0, %v744
        %746 = vmatmul.f32.gmra.mxu0 %v463
        %v747 = vpop.f32.mrf.mxu0
        %v748 = vadd.f32 0.0, %v747
        %749 = vmatmul.f32.gmra.mxu0 %v465
        %v750 = vpop.f32.mrf.mxu0
        %v751 = vadd.f32 0.0, %v750
        %752 = vmatmul.f32.gmra.mxu0 %v467
        %v753 = vpop.f32.mrf.mxu0
        %v754 = vadd.f32 0.0, %v753
        %755 = vmatmul.f32.gmra.mxu0 %v469
        %v756 = vpop.f32.mrf.mxu0
        %v757 = vadd.f32 0.0, %v756
        %758 = vmatmul.f32.gmra.mxu0 %v471
        %v759 = vpop.f32.mrf.mxu0
        %v760 = vadd.f32 0.0, %v759
        %761 = vmatmul.f32.gmra.mxu0 %v473
        %v762 = vpop.f32.mrf.mxu0
        %v763 = vadd.f32 0.0, %v762
        %764 = vmatmul.f32.gmra.mxu0 %v475
        %v765 = vpop.f32.mrf.mxu0
        %v766 = vadd.f32 0.0, %v765
        %767 = vmatmul.f32.gmra.mxu0 %v477
        %v768 = vpop.f32.mrf.mxu0
        %v769 = vadd.f32 0.0, %v768
        %770 = vmatmul.f32.gmra.mxu0 %v479
        %v771 = vpop.f32.mrf.mxu0
        %v772 = vadd.f32 0.0, %v771
        %773 = vmatmul.f32.gmra.mxu0 %v707
        %v774 = vpop.f32.mrf.mxu0
        %v775 = vadd.f32 0.0, %v774
        %776 = vmatmul.f32.gmra.mxu0 %v710
        %v777 = vpop.f32.mrf.mxu0
        %v778 = vadd.f32 0.0, %v777
        %779 = vdwg.mxu0
        %v780 = vadd.f32 %v690, %v733
        %v781 = vadd.f32 %v691, %v736
        %v782 = vadd.f32 %v692, %v739
        %v783 = vadd.f32 %v693, %v742
        %v784 = vadd.f32 %v694, %v745
        %v785 = vadd.f32 %v695, %v748
        %v786 = vadd.f32 %v696, %v751
        %v787 = vadd.f32 %v697, %v754
        %v788 = vadd.f32 %v698, %v757
        %v789 = vadd.f32 %v699, %v760
        %v790 = vadd.f32 %v700, %v763
        %v791 = vadd.f32 %v701, %v766
        %v792 = vadd.f32 %v702, %v769
        %v793 = vadd.f32 %v703, %v772
        %v794 = vadd.f32 %v704, %v775
        %v795 = vadd.f32 %v705, %v778
        %v797 = vrot.slane %v267, 1
        %v798 = vrot.slane %v268, 1
        %v799 = vsel %vm306, %v797, %v798
        %v800 = vrot.slane %v269, 1
        %v801 = vsel %vm306, %v798, %v800
        %v802 = vsel %vm347, %v799, 0
        %v804 = vsel %vm347, %v801, 0
        %v807 = vsel %vm380, %v277, 0
        %809 = vmatpush.msra.mxu0 0.0
        %810 = vmatpush.msra.mxu0 0.0
        %811 = vmatpush.msra.mxu0 0.0
        %812 = vmatpush.msra.mxu0 0.0
        %813 = vmatpush.msra.mxu0 0.0
        %814 = vmatpush.msra.mxu0 0.0
        %815 = vmatpush.msra.mxu0 0.0
        %816 = vmatpush.msra.mxu0 0.0
        %817 = vmatpush.msra.mxu0 0.0
        %818 = vmatpush.msra.mxu0 0.0
        %819 = vmatpush.msra.mxu0 0.0
        %820 = vmatpush.msra.mxu0 0.0
        %821 = vmatpush.msra.mxu0 0.0
        %822 = vmatpush.msra.mxu0 0.0
        %823 = vmatpush.msra.mxu0 0.0
        %824 = vmatpush.msra.mxu0 %v807
        %825 = vmatmul.f32.gmra.mxu0 %v352
        %v826 = vpop.f32.mrf.mxu0
        %v827 = vadd.f32 0.0, %v826
        %828 = vmatmul.f32.gmra.mxu0 %v354
        %v829 = vpop.f32.mrf.mxu0
        %v830 = vadd.f32 0.0, %v829
        %831 = vmatmul.f32.gmra.mxu0 %v356
        %v832 = vpop.f32.mrf.mxu0
        %v833 = vadd.f32 0.0, %v832
        %834 = vmatmul.f32.gmra.mxu0 %v358
        %v835 = vpop.f32.mrf.mxu0
        %v836 = vadd.f32 0.0, %v835
        %837 = vmatmul.f32.gmra.mxu0 %v360
        %v838 = vpop.f32.mrf.mxu0
        %v839 = vadd.f32 0.0, %v838
        %840 = vmatmul.f32.gmra.mxu0 %v362
        %v841 = vpop.f32.mrf.mxu0
        %v842 = vadd.f32 0.0, %v841
        %843 = vmatmul.f32.gmra.mxu0 %v364
        %v844 = vpop.f32.mrf.mxu0
        %v845 = vadd.f32 0.0, %v844
        %846 = vmatmul.f32.gmra.mxu0 %v366
        %v847 = vpop.f32.mrf.mxu0
        %v848 = vadd.f32 0.0, %v847
        %849 = vmatmul.f32.gmra.mxu0 %v368
        %v850 = vpop.f32.mrf.mxu0
        %v851 = vadd.f32 0.0, %v850
        %852 = vmatmul.f32.gmra.mxu0 %v370
        %v853 = vpop.f32.mrf.mxu0
        %v854 = vadd.f32 0.0, %v853
        %855 = vmatmul.f32.gmra.mxu0 %v372
        %v856 = vpop.f32.mrf.mxu0
        %v857 = vadd.f32 0.0, %v856
        %858 = vmatmul.f32.gmra.mxu0 %v374
        %v859 = vpop.f32.mrf.mxu0
        %v860 = vadd.f32 0.0, %v859
        %861 = vmatmul.f32.gmra.mxu0 %v376
        %v862 = vpop.f32.mrf.mxu0
        %v863 = vadd.f32 0.0, %v862
        %864 = vmatmul.f32.gmra.mxu0 %v378
        %v865 = vpop.f32.mrf.mxu0
        %v866 = vadd.f32 0.0, %v865
        %867 = vmatmul.f32.gmra.mxu0 %v802
        %v868 = vpop.f32.mrf.mxu0
        %v869 = vadd.f32 0.0, %v868
        %870 = vmatmul.f32.gmra.mxu0 %v804
        %v871 = vpop.f32.mrf.mxu0
        %v872 = vadd.f32 0.0, %v871
        %873 = vdwg.mxu0
        %v874 = vadd.f32 %v780, %v827
        %v875 = vadd.f32 %v781, %v830
        %v876 = vadd.f32 %v782, %v833
        %v877 = vadd.f32 %v783, %v836
        %v878 = vadd.f32 %v784, %v839
        %v879 = vadd.f32 %v785, %v842
        %v880 = vadd.f32 %v786, %v845
        %v881 = vadd.f32 %v787, %v848
        %v882 = vadd.f32 %v788, %v851
        %v883 = vadd.f32 %v789, %v854
        %v884 = vadd.f32 %v790, %v857
        %v885 = vadd.f32 %v791, %v860
        %v886 = vadd.f32 %v792, %v863
        %v887 = vadd.f32 %v793, %v866
        %v888 = vadd.f32 %v794, %v869
        %v889 = vadd.f32 %v795, %v872
        %v890 = vrot.slane %v267, 2
        %v891 = vrot.slane %v268, 2
        %v892 = vsel %vm549, %v890, %v891
        %v893 = vrot.slane %v269, 2
        %v894 = vsel %vm549, %v891, %v893
        %v895 = vsel %vm347, %v892, 0
        %v897 = vsel %vm347, %v894, 0
        %v900 = vsel %vm380, %v278, 0
        %902 = vmatpush.msra.mxu0 0.0
        %903 = vmatpush.msra.mxu0 0.0
        %904 = vmatpush.msra.mxu0 0.0
        %905 = vmatpush.msra.mxu0 0.0
        %906 = vmatpush.msra.mxu0 0.0
        %907 = vmatpush.msra.mxu0 0.0
        %908 = vmatpush.msra.mxu0 0.0
        %909 = vmatpush.msra.mxu0 0.0
        %910 = vmatpush.msra.mxu0 0.0
        %911 = vmatpush.msra.mxu0 0.0
        %912 = vmatpush.msra.mxu0 0.0
        %913 = vmatpush.msra.mxu0 0.0
        %914 = vmatpush.msra.mxu0 0.0
        %915 = vmatpush.msra.mxu0 0.0
        %916 = vmatpush.msra.mxu0 0.0
        %917 = vmatpush.msra.mxu0 %v900
        %918 = vmatmul.f32.gmra.mxu0 %v594
        %v919 = vpop.f32.mrf.mxu0
        %v920 = vadd.f32 0.0, %v919
        %921 = vmatmul.f32.gmra.mxu0 %v596
        %v922 = vpop.f32.mrf.mxu0
        %v923 = vadd.f32 0.0, %v922
        %924 = vmatmul.f32.gmra.mxu0 %v598
        %v925 = vpop.f32.mrf.mxu0
        %v926 = vadd.f32 0.0, %v925
        %927 = vmatmul.f32.gmra.mxu0 %v600
        %v928 = vpop.f32.mrf.mxu0
        %v929 = vadd.f32 0.0, %v928
        %930 = vmatmul.f32.gmra.mxu0 %v602
        %v931 = vpop.f32.mrf.mxu0
        %v932 = vadd.f32 0.0, %v931
        %933 = vmatmul.f32.gmra.mxu0 %v604
        %v934 = vpop.f32.mrf.mxu0
        %v935 = vadd.f32 0.0, %v934
        %936 = vmatmul.f32.gmra.mxu0 %v606
        %v937 = vpop.f32.mrf.mxu0
        %v938 = vadd.f32 0.0, %v937
        %939 = vmatmul.f32.gmra.mxu0 %v608
        %v940 = vpop.f32.mrf.mxu0
        %v941 = vadd.f32 0.0, %v940
        %942 = vmatmul.f32.gmra.mxu0 %v610
        %v943 = vpop.f32.mrf.mxu0
        %v944 = vadd.f32 0.0, %v943
        %945 = vmatmul.f32.gmra.mxu0 %v612
        %v946 = vpop.f32.mrf.mxu0
        %v947 = vadd.f32 0.0, %v946
        %948 = vmatmul.f32.gmra.mxu0 %v614
        %v949 = vpop.f32.mrf.mxu0
        %v950 = vadd.f32 0.0, %v949
        %951 = vmatmul.f32.gmra.mxu0 %v616
        %v952 = vpop.f32.mrf.mxu0
        %v953 = vadd.f32 0.0, %v952
        %954 = vmatmul.f32.gmra.mxu0 %v618
        %v955 = vpop.f32.mrf.mxu0
        %v956 = vadd.f32 0.0, %v955
        %957 = vmatmul.f32.gmra.mxu0 %v620
        %v958 = vpop.f32.mrf.mxu0
        %v959 = vadd.f32 0.0, %v958
        %960 = vmatmul.f32.gmra.mxu0 %v895
        %v961 = vpop.f32.mrf.mxu0
        %v962 = vadd.f32 0.0, %v961
        %963 = vmatmul.f32.gmra.mxu0 %v897
        %v964 = vpop.f32.mrf.mxu0
        %v965 = vadd.f32 0.0, %v964
        %966 = vdwg.mxu0
        %v967 = vadd.f32 %v874, %v920
        %v968 = vadd.f32 %v875, %v923
        %v969 = vadd.f32 %v876, %v926
        %v970 = vadd.f32 %v877, %v929
        %v971 = vadd.f32 %v878, %v932
        %v972 = vadd.f32 %v879, %v935
        %v973 = vadd.f32 %v880, %v938
        %v974 = vadd.f32 %v881, %v941
        %v975 = vadd.f32 %v882, %v944
        %v976 = vadd.f32 %v883, %v947
        %v977 = vadd.f32 %v884, %v950
        %v978 = vadd.f32 %v885, %v953
        %v979 = vadd.f32 %v886, %v956
        %v980 = vadd.f32 %v887, %v959
        %v981 = vadd.f32 %v888, %v962
        %v982 = vadd.f32 %v889, %v965
        %v984 = vsel %vm347, %v270, 0
        %v987 = vsel %vm347, %v271, 0
        %v990 = vsel %vm380, %v279, 0
        %992 = vmatpush.msra.mxu0 0.0
        %993 = vmatpush.msra.mxu0 0.0
        %994 = vmatpush.msra.mxu0 0.0
        %995 = vmatpush.msra.mxu0 0.0
        %996 = vmatpush.msra.mxu0 0.0
        %997 = vmatpush.msra.mxu0 0.0
        %998 = vmatpush.msra.mxu0 0.0
        %999 = vmatpush.msra.mxu0 0.0
        %1000 = vmatpush.msra.mxu0 0.0
        %1001 = vmatpush.msra.mxu0 0.0
        %1002 = vmatpush.msra.mxu0 0.0
        %1003 = vmatpush.msra.mxu0 0.0
        %1004 = vmatpush.msra.mxu0 0.0
        %1005 = vmatpush.msra.mxu0 0.0
        %1006 = vmatpush.msra.mxu0 0.0
        %1007 = vmatpush.msra.mxu0 %v990
        %1008 = vmatmul.f32.gmra.mxu0 %v457
        %v1009 = vpop.f32.mrf.mxu0
        %v1010 = vadd.f32 0.0, %v1009
        %1011 = vmatmul.f32.gmra.mxu0 %v459
        %v1012 = vpop.f32.mrf.mxu0
        %v1013 = vadd.f32 0.0, %v1012
        %1014 = vmatmul.f32.gmra.mxu0 %v461
        %v1015 = vpop.f32.mrf.mxu0
        %v1016 = vadd.f32 0.0, %v1015
        %1017 = vmatmul.f32.gmra.mxu0 %v463
        %v1018 = vpop.f32.mrf.mxu0
        %v1019 = vadd.f32 0.0, %v1018
        %1020 = vmatmul.f32.gmra.mxu0 %v465
        %v1021 = vpop.f32.mrf.mxu0
        %v1022 = vadd.f32 0.0, %v1021
        %1023 = vmatmul.f32.gmra.mxu0 %v467
        %v1024 = vpop.f32.mrf.mxu0
        %v1025 = vadd.f32 0.0, %v1024
        %1026 = vmatmul.f32.gmra.mxu0 %v469
        %v1027 = vpop.f32.mrf.mxu0
        %v1028 = vadd.f32 0.0, %v1027
        %1029 = vmatmul.f32.gmra.mxu0 %v471
        %v1030 = vpop.f32.mrf.mxu0
        %v1031 = vadd.f32 0.0, %v1030
        %1032 = vmatmul.f32.gmra.mxu0 %v473
        %v1033 = vpop.f32.mrf.mxu0
        %v1034 = vadd.f32 0.0, %v1033
        %1035 = vmatmul.f32.gmra.mxu0 %v475
        %v1036 = vpop.f32.mrf.mxu0
        %v1037 = vadd.f32 0.0, %v1036
        %1038 = vmatmul.f32.gmra.mxu0 %v477
        %v1039 = vpop.f32.mrf.mxu0
        %v1040 = vadd.f32 0.0, %v1039
        %1041 = vmatmul.f32.gmra.mxu0 %v479
        %v1042 = vpop.f32.mrf.mxu0
        %v1043 = vadd.f32 0.0, %v1042
        %1044 = vmatmul.f32.gmra.mxu0 %v707
        %v1045 = vpop.f32.mrf.mxu0
        %v1046 = vadd.f32 0.0, %v1045
        %1047 = vmatmul.f32.gmra.mxu0 %v710
        %v1048 = vpop.f32.mrf.mxu0
        %v1049 = vadd.f32 0.0, %v1048
        %1050 = vmatmul.f32.gmra.mxu0 %v984
        %v1051 = vpop.f32.mrf.mxu0
        %v1052 = vadd.f32 0.0, %v1051
        %1053 = vmatmul.f32.gmra.mxu0 %v987
        %v1054 = vpop.f32.mrf.mxu0
        %v1055 = vadd.f32 0.0, %v1054
        %1056 = vdwg.mxu0
        %v1057 = vadd.f32 %v967, %v1010
        %v1058 = vadd.f32 %v968, %v1013
        %v1059 = vadd.f32 %v969, %v1016
        %v1060 = vadd.f32 %v970, %v1019
        %v1061 = vadd.f32 %v971, %v1022
        %v1062 = vadd.f32 %v972, %v1025
        %v1063 = vadd.f32 %v973, %v1028
        %v1064 = vadd.f32 %v974, %v1031
        %v1065 = vadd.f32 %v975, %v1034
        %v1066 = vadd.f32 %v976, %v1037
        %v1067 = vadd.f32 %v977, %v1040
        %v1068 = vadd.f32 %v978, %v1043
        %v1069 = vadd.f32 %v979, %v1046
        %v1070 = vadd.f32 %v980, %v1049
        %v1071 = vadd.f32 %v981, %v1052
        %v1072 = vadd.f32 %v982, %v1055
        %v1074 = vrot.slane %v270, 1
        %v1075 = vrot.slane %v271, 1
        %v1076 = vsel %vm306, %v1074, %v1075
        %v1077 = vrot.slane %v272, 1
        %v1078 = vsel %vm306, %v1075, %v1077
        %v1079 = vsel %vm347, %v1076, 0
        %v1081 = vsel %vm347, %v1078, 0
        %v1084 = vsel %vm380, %v280, 0
        %1086 = vmatpush.msra.mxu0 0.0
        %1087 = vmatpush.msra.mxu0 0.0
        %1088 = vmatpush.msra.mxu0 0.0
        %1089 = vmatpush.msra.mxu0 0.0
        %1090 = vmatpush.msra.mxu0 0.0
        %1091 = vmatpush.msra.mxu0 0.0
        %1092 = vmatpush.msra.mxu0 0.0
        %1093 = vmatpush.msra.mxu0 0.0
        %1094 = vmatpush.msra.mxu0 0.0
        %1095 = vmatpush.msra.mxu0 0.0
        %1096 = vmatpush.msra.mxu0 0.0
        %1097 = vmatpush.msra.mxu0 0.0
        %1098 = vmatpush.msra.mxu0 0.0
        %1099 = vmatpush.msra.mxu0 0.0
        %1100 = vmatpush.msra.mxu0 0.0
        %1101 = vmatpush.msra.mxu0 %v1084
        %1102 = vmatmul.f32.gmra.mxu0 %v356
        %v1103 = vpop.f32.mrf.mxu0
        %v1104 = vadd.f32 0.0, %v1103
        %1105 = vmatmul.f32.gmra.mxu0 %v358
        %v1106 = vpop.f32.mrf.mxu0
        %v1107 = vadd.f32 0.0, %v1106
        %1108 = vmatmul.f32.gmra.mxu0 %v360
        %v1109 = vpop.f32.mrf.mxu0
        %v1110 = vadd.f32 0.0, %v1109
        %1111 = vmatmul.f32.gmra.mxu0 %v362
        %v1112 = vpop.f32.mrf.mxu0
        %v1113 = vadd.f32 0.0, %v1112
        %1114 = vmatmul.f32.gmra.mxu0 %v364
        %v1115 = vpop.f32.mrf.mxu0
        %v1116 = vadd.f32 0.0, %v1115
        %1117 = vmatmul.f32.gmra.mxu0 %v366
        %v1118 = vpop.f32.mrf.mxu0
        %v1119 = vadd.f32 0.0, %v1118
        %1120 = vmatmul.f32.gmra.mxu0 %v368
        %v1121 = vpop.f32.mrf.mxu0
        %v1122 = vadd.f32 0.0, %v1121
        %1123 = vmatmul.f32.gmra.mxu0 %v370
        %v1124 = vpop.f32.mrf.mxu0
        %v1125 = vadd.f32 0.0, %v1124
        %1126 = vmatmul.f32.gmra.mxu0 %v372
        %v1127 = vpop.f32.mrf.mxu0
        %v1128 = vadd.f32 0.0, %v1127
        %1129 = vmatmul.f32.gmra.mxu0 %v374
        %v1130 = vpop.f32.mrf.mxu0
        %v1131 = vadd.f32 0.0, %v1130
        %1132 = vmatmul.f32.gmra.mxu0 %v376
        %v1133 = vpop.f32.mrf.mxu0
        %v1134 = vadd.f32 0.0, %v1133
        %1135 = vmatmul.f32.gmra.mxu0 %v378
        %v1136 = vpop.f32.mrf.mxu0
        %v1137 = vadd.f32 0.0, %v1136
        %1138 = vmatmul.f32.gmra.mxu0 %v802
        %v1139 = vpop.f32.mrf.mxu0
        %v1140 = vadd.f32 0.0, %v1139
        %1141 = vmatmul.f32.gmra.mxu0 %v804
        %v1142 = vpop.f32.mrf.mxu0
        %v1143 = vadd.f32 0.0, %v1142
        %1144 = vmatmul.f32.gmra.mxu0 %v1079
        %v1145 = vpop.f32.mrf.mxu0
        %v1146 = vadd.f32 0.0, %v1145
        %1147 = vmatmul.f32.gmra.mxu0 %v1081
        %v1148 = vpop.f32.mrf.mxu0
        %v1149 = vadd.f32 0.0, %v1148
        %1150 = vdwg.mxu0
        %v1151 = vadd.f32 %v1057, %v1104
        %v1152 = vadd.f32 %v1058, %v1107
        %v1153 = vadd.f32 %v1059, %v1110
        %v1154 = vadd.f32 %v1060, %v1113
        %v1155 = vadd.f32 %v1061, %v1116
        %v1156 = vadd.f32 %v1062, %v1119
        %v1157 = vadd.f32 %v1063, %v1122
        %v1158 = vadd.f32 %v1064, %v1125
        %v1159 = vadd.f32 %v1065, %v1128
        %v1160 = vadd.f32 %v1066, %v1131
        %v1161 = vadd.f32 %v1067, %v1134
        %v1162 = vadd.f32 %v1068, %v1137
        %v1163 = vadd.f32 %v1069, %v1140
        %v1164 = vadd.f32 %v1070, %v1143
        %v1165 = vadd.f32 %v1071, %v1146
        %v1166 = vadd.f32 %v1072, %v1149
        %v1167 = vrot.slane %v270, 2
        %v1168 = vrot.slane %v271, 2
        %v1169 = vsel %vm549, %v1167, %v1168
        %v1170 = vrot.slane %v272, 2
        %v1171 = vsel %vm549, %v1168, %v1170
        %v1172 = vsel %vm347, %v1169, 0
        %v1174 = vsel %vm347, %v1171, 0
        %v1177 = vsel %vm380, %v281, 0
        %1179 = vmatpush.msra.mxu0 0.0
        %1180 = vmatpush.msra.mxu0 0.0
        %1181 = vmatpush.msra.mxu0 0.0
        %1182 = vmatpush.msra.mxu0 0.0
        %1183 = vmatpush.msra.mxu0 0.0
        %1184 = vmatpush.msra.mxu0 0.0
        %1185 = vmatpush.msra.mxu0 0.0
        %1186 = vmatpush.msra.mxu0 0.0
        %1187 = vmatpush.msra.mxu0 0.0
        %1188 = vmatpush.msra.mxu0 0.0
        %1189 = vmatpush.msra.mxu0 0.0
        %1190 = vmatpush.msra.mxu0 0.0
        %1191 = vmatpush.msra.mxu0 0.0
        %1192 = vmatpush.msra.mxu0 0.0
        %1193 = vmatpush.msra.mxu0 0.0
        %1194 = vmatpush.msra.mxu0 %v1177
        %1195 = vmatmul.f32.gmra.mxu0 %v598
        %v1196 = vpop.f32.mrf.mxu0
        %v1197 = vadd.f32 0.0, %v1196
        %1198 = vmatmul.f32.gmra.mxu0 %v600
        %v1199 = vpop.f32.mrf.mxu0
        %v1200 = vadd.f32 0.0, %v1199
        %1201 = vmatmul.f32.gmra.mxu0 %v602
        %v1202 = vpop.f32.mrf.mxu0
        %v1203 = vadd.f32 0.0, %v1202
        %1204 = vmatmul.f32.gmra.mxu0 %v604
        %v1205 = vpop.f32.mrf.mxu0
        %v1206 = vadd.f32 0.0, %v1205
        %1207 = vmatmul.f32.gmra.mxu0 %v606
        %v1208 = vpop.f32.mrf.mxu0
        %v1209 = vadd.f32 0.0, %v1208
        %1210 = vmatmul.f32.gmra.mxu0 %v608
        %v1211 = vpop.f32.mrf.mxu0
        %v1212 = vadd.f32 0.0, %v1211
        %1213 = vmatmul.f32.gmra.mxu0 %v610
        %v1214 = vpop.f32.mrf.mxu0
        %v1215 = vadd.f32 0.0, %v1214
        %1216 = vmatmul.f32.gmra.mxu0 %v612
        %v1217 = vpop.f32.mrf.mxu0
        %v1218 = vadd.f32 0.0, %v1217
        %1219 = vmatmul.f32.gmra.mxu0 %v614
        %v1220 = vpop.f32.mrf.mxu0
        %v1221 = vadd.f32 0.0, %v1220
        %1222 = vmatmul.f32.gmra.mxu0 %v616
        %v1223 = vpop.f32.mrf.mxu0
        %v1224 = vadd.f32 0.0, %v1223
        %1225 = vmatmul.f32.gmra.mxu0 %v618
        %v1226 = vpop.f32.mrf.mxu0
        %v1227 = vadd.f32 0.0, %v1226
        %1228 = vmatmul.f32.gmra.mxu0 %v620
        %v1229 = vpop.f32.mrf.mxu0
        %v1230 = vadd.f32 0.0, %v1229
        %1231 = vmatmul.f32.gmra.mxu0 %v895
        %v1232 = vpop.f32.mrf.mxu0
        %v1233 = vadd.f32 0.0, %v1232
        %1234 = vmatmul.f32.gmra.mxu0 %v897
        %v1235 = vpop.f32.mrf.mxu0
        %v1236 = vadd.f32 0.0, %v1235
        %1237 = vmatmul.f32.gmra.mxu0 %v1172
        %v1238 = vpop.f32.mrf.mxu0
        %v1239 = vadd.f32 0.0, %v1238
        %1240 = vmatmul.f32.gmra.mxu0 %v1174
        %v1241 = vpop.f32.mrf.mxu0
        %v1242 = vadd.f32 0.0, %v1241
        %1243 = vdwg.mxu0
        %v1244 = vadd.f32 %v1151, %v1197
        %v1245 = vadd.f32 %v1152, %v1200
        %v1246 = vadd.f32 %v1153, %v1203
        %v1247 = vadd.f32 %v1154, %v1206
        %v1248 = vadd.f32 %v1155, %v1209
        %v1249 = vadd.f32 %v1156, %v1212
        %v1250 = vadd.f32 %v1157, %v1215
        %v1251 = vadd.f32 %v1158, %v1218
        %v1252 = vadd.f32 %v1159, %v1221
        %v1253 = vadd.f32 %v1160, %v1224
        %v1254 = vadd.f32 %v1161, %v1227
        %v1255 = vadd.f32 %v1162, %v1230
        %v1256 = vadd.f32 %v1163, %v1233
        %v1257 = vadd.f32 %v1164, %v1236
        %v1258 = vadd.f32 %v1165, %v1239
        %v1259 = vadd.f32 %v1166, %v1242
        %v1260 = vld [vmem:[%s2] sm:$0x1]
        %v1262 = vperm.slane %v1260, 0
        %v1264 = vadd.f32 %v1244, %v1262
        %v1265 = vadd.f32 %v1245, %v1262
        %v1266 = vadd.f32 %v1246, %v1262
        %v1267 = vadd.f32 %v1247, %v1262
        %v1268 = vadd.f32 %v1248, %v1262
        %v1269 = vadd.f32 %v1249, %v1262
        %v1270 = vadd.f32 %v1250, %v1262
        %v1271 = vadd.f32 %v1251, %v1262
        %v1272 = vadd.f32 %v1252, %v1262
        %v1273 = vadd.f32 %v1253, %v1262
        %v1274 = vadd.f32 %v1254, %v1262
        %v1275 = vadd.f32 %v1255, %v1262
        %v1276 = vadd.f32 %v1256, %v1262
        %v1277 = vadd.f32 %v1257, %v1262
        %v1278 = vadd.f32 %v1258, %v1262
        %v1279 = vadd.f32 %v1259, %v1262
        %v1280 = vmax.f32 %v1264, 0.0
        %v1281 = vmax.f32 %v1265, 0.0
        %v1282 = vmax.f32 %v1266, 0.0
        %v1283 = vmax.f32 %v1267, 0.0
        %v1284 = vmax.f32 %v1268, 0.0
        %v1285 = vmax.f32 %v1269, 0.0
        %v1286 = vmax.f32 %v1270, 0.0
        %v1287 = vmax.f32 %v1271, 0.0
        %v1288 = vmax.f32 %v1272, 0.0
        %v1289 = vmax.f32 %v1273, 0.0
        %v1290 = vmax.f32 %v1274, 0.0
        %v1291 = vmax.f32 %v1275, 0.0
        %v1292 = vmax.f32 %v1276, 0.0
        %v1293 = vmax.f32 %v1277, 0.0
        %v1294 = vmax.f32 %v1278, 0.0
        %v1295 = vmax.f32 %v1279, 0.0
        %v1296 = vld [vmem:[#allocation2] sm:$0x1]
        %vm1297 = vcmask 261120
        %v1298 = vsel %vm1297, %v1280, 0.0
        %v1299 = vsel %vm1297, %v1281, 0.0
        %v1300 = vadd.f32 %v1298, %v1299
        %v1301 = vsel %vm1297, %v1282, 0.0
        %v1302 = vadd.f32 %v1300, %v1301
        %v1303 = vsel %vm1297, %v1283, 0.0
        %v1304 = vadd.f32 %v1302, %v1303
        %v1305 = vsel %vm1297, %v1284, 0.0
        %v1306 = vadd.f32 %v1304, %v1305
        %v1307 = vsel %vm1297, %v1285, 0.0
        %v1308 = vadd.f32 %v1306, %v1307
        %v1309 = vsel %vm1297, %v1286, 0.0
        %v1310 = vadd.f32 %v1308, %v1309
        %v1311 = vsel %vm1297, %v1287, 0.0
        %v1312 = vadd.f32 %v1310, %v1311
        %v1313 = vsel %vm1297, %v1288, 0.0
        %v1314 = vadd.f32 %v1312, %v1313
        %v1315 = vsel %vm1297, %v1289, 0.0
        %v1316 = vadd.f32 %v1314, %v1315
        %v1317 = vsel %vm1297, %v1290, 0.0
        %v1318 = vadd.f32 %v1316, %v1317
        %v1319 = vsel %vm1297, %v1291, 0.0
        %v1320 = vadd.f32 %v1318, %v1319
        %v1321 = vsel %vm1297, %v1292, 0.0
        %v1322 = vadd.f32 %v1320, %v1321
        %v1323 = vsel %vm1297, %v1293, 0.0
        %v1324 = vadd.f32 %v1322, %v1323
        %v1325 = vsel %vm1297, %v1294, 0.0
        %v1326 = vadd.f32 %v1324, %v1325
        %v1327 = vsel %vm1297, %v1295, 0.0
        %v1328 = vadd.f32 %v1326, %v1327
        %v1329 = vrot.slane %v1328, 4
        %v1330 = vadd.f32 %v1328, %v1329
        %v1331 = vrot.slane %v1330, 2
        %v1332 = vadd.f32 %v1330, %v1331
        %v1333 = vrot.slane %v1332, 1
        %v1334 = vadd.f32 %v1332, %v1333
        %v1335 = vadd.f32 %v1296, %v1334
        %vm1336 = vcmask 253952
        %1337 = vst.msk [vmem:[#allocation2] sm:$0x1] %vm1336, %v1335
        %p1338 = scmp.eq.s32.totalorder %s24, 1
        // Predicated region
        $region45: #{tpu_custom_call.1} parent=39 // pred_check
          %p1339 = pneg %p1338
        $region46: #{tpu_custom_call.1} parent=39 // pred_check_branch
          %1341 = sbr.rel (%p1339) target = $region48
        $region47: #{tpu_custom_call.1} parent=39 // pred_region
          %v1342 = vld [vmem:[#allocation2] sm:$0x1]
          %v1343 = vmul.f32 %v1342, 0.00390625
          %v1344 = vld [vmem:[%s3] sm:$0xff]
          %v1345 = vld [vmem:[%s3 + $0x8] sm:$0xff]
          %v1346 = vld [vmem:[%s3 + $0x10] sm:$0xff]
          %v1347 = vld [vmem:[%s3 + $0x18] sm:$0xff]
          %v1348 = vld [vmem:[%s4] sm:$0x1]
          %v1350 = vsel %vm1297, %v1343, 0
          %1352 = vmatpush.msra.mxu0 0.0
          %1353 = vmatpush.msra.mxu0 0.0
          %1354 = vmatpush.msra.mxu0 0.0
          %1355 = vmatpush.msra.mxu0 0.0
          %1356 = vmatpush.msra.mxu0 0.0
          %1357 = vmatpush.msra.mxu0 0.0
          %1358 = vmatpush.msra.mxu0 0.0
          %1359 = vmatpush.msra.mxu0 0.0
          %1360 = vmatpush.msra.mxu0 0.0
          %1361 = vmatpush.msra.mxu0 0.0
          %1362 = vmatpush.msra.mxu0 0.0
          %1363 = vmatpush.msra.mxu0 0.0
          %1364 = vmatpush.msra.mxu0 %v1347
          %1365 = vmatpush.msra.mxu0 %v1346
          %1366 = vmatpush.msra.mxu0 %v1345
          %1367 = vmatpush.msra.mxu0 %v1344
          %1368 = vmatmul.f32.gmra.mxu0 %v1350
          %v1369 = vpop.f32.mrf.mxu0
          %v1370 = vadd.f32 %v1348, %v1369
          %1371 = vdwg.mxu0
          %v1372 = vsub.f32 0.0, %v1370
          %v1373 = vmul.f32 %v1372, 1.442695
          %v1374 = vpow.pop %v1373
          %v1375 = vadd.f32 %v1374, 1.0
          %v1376 = vrcp.pop %v1375
          %v1377 = vmul.f32 %v1375, %v1376
          %v1378 = vsub.f32 1.0, %v1377
          %v1379 = vmul.f32 %v1376, %v1378
          %v1380 = vadd.f32 %v1376, %v1379
          %vm1381 = vweird.f32 %v1375
          %vm1382 = vweird.f32 %v1376
          %vm1383 = vmor %vm1381, %vm1382
          %v1384 = vsel %vm1383, %v1376, %v1380
          %v1385 = vand.u32 2147483647, %v1375
          %vm1386 = vcmp.eq.f32.partialorder %v1385, 8.507059e+37
          %v1387 = vand.u32 %v1375, 2147483648
          %v1388 = vor.u32 1.1754944e-38, %v1387
          %v1389 = vsel %vm1386, %v1388, %v1384
          %v1390 = vmul.f32 1.0, %v1389
          %v1391 = vmul.f32 %v1370, 1.442695
          %v1392 = vpow.pop %v1391
          %vm1393 = vcmask 7168
          %v1394 = vsel %vm1393, %v1390, %v1392
          %vm1395 = vcmask 8192
          %1396 = vst.msk [vmem:[%s228] sm:$0x1] %vm1395, %v1394
        $region48: #{tpu_custom_call.1} parent=39 // pred_fallthru
          _
        %s1397 = sand.u32 %s149, 1
        %s1398 = scalar_lea.sflag [#allocation4], %s1397
        %s1399 = sand.u32 %s149, 1
        %s1400 = scalar_lea.vmem [#allocation3], %s1399
        // Predicated region
        $region49: #{tpu_custom_call.1} parent=39 // pred_check
          %p1401 = pneg %p159
        $region50: #{tpu_custom_call.1} parent=39 // pred_check_branch
          %1403 = sbr.rel (%p1401) target = $region52
        $region51: #{tpu_custom_call.1} parent=39 // pred_region
          %1405 = vsyncadd %s1398, 0
          %s1406 = scalar_lea.hbm %s5, %s23
          %s1408 = sshll.u32 %s1400, 4
          %s1409 = int_to_ptr.vmem [resolvable:$true] %s1408
          %s1410 = sshll.u32 %s1406, 4
          %s1411 = int_to_ptr.hbm [resolvable:$true] %s1410
          %1413 = dma.vmem_to_hbm [thread:$0]  %s1409, 16, %s1411, %s1398
        $region52: #{tpu_custom_call.1} parent=39 // pred_fallthru
          _
      $region40: #{tpu_custom_call.1} parent=5 // pred_fallthru
        _
      %p1414 = scmp.le.s32.totalorder 2, %s14
      // Predicated region
      $region53: #{tpu_custom_call.1} parent=5 // pred_check
        %p1415 = pneg %p1414
      $region54: #{tpu_custom_call.1} parent=5 // pred_check_branch
        %1417 = sbr.rel (%p1415) target = $region56
      $region55: #{tpu_custom_call.1} parent=5 // pred_region
        %s1418 = ssub.s32 %s14, 2
        // Predicated region
        $region57: #{tpu_custom_call.1} parent=55 // pred_check
          %p1419 = pneg %p165
        $region58: #{tpu_custom_call.1} parent=55 // pred_check_branch
          %1421 = sbr.rel (%p1419) target = $region60
        $region59: #{tpu_custom_call.1} parent=55 // pred_region
          %s1422 = sand.u32 %s150, 1
          %s1423 = scalar_lea.sflag [#allocation4], %s1422
          %s1424 = sand.u32 %s150, 1
          %s1425 = scalar_lea.vmem [#allocation3], %s1424
          %1427 = dma.done %s1423, 16
        $region60: #{tpu_custom_call.1} parent=55 // pred_fallthru
          _
      $region56: #{tpu_custom_call.1} parent=5 // pred_fallthru
        _
    $region6: #{tpu_custom_call.1} parent=1 // loop_footer
      %s18 = sadd.s32 1, %s14
    $region7: #{tpu_custom_call.1} parent=1 // loop_footer_branch
      %13 = sbr.rel target = $region3
    $region8: #{tpu_custom_call.1} parent=1 // loop_exit
      _
    %1428 = vsyncpa [#allocation4], 1
    %s1429 = scalar_lea.sflag [#allocation4], 1
    %1430 = vsyncpa %s1429, 1

</llo_original>
